<compile_context>
chip_gen: v5e
topology: v5e:2x2
jax: 0.10.0
libtpu: 0.0.40
codegen_flags: <defaults>
</compile_context>

<pallas_src>
import functools

import jax
import jax.numpy as jnp
from jax import lax
from jax.experimental import pallas as pl
from jax.experimental.pallas import tpu as pltpu


def _round_up(n, m):
    return ((n + m - 1) // m) * m


# ---------------------------------------------------------------------------
# Recurrence kernel: one fused h @ U matmul per timestep, chunked over time.
# ---------------------------------------------------------------------------
def gru_recurrent_kernel(xg_ref, h0_ref, u_ref, out_ref, hfinal_ref, h_scr,
                         *, seq_len, t_chunk, hidden):
    c = pl.program_id(1)            # sequential chunk index ("arbitrary")

    @pl.when(c == 0)
    def _init():
        h_scr[...] = h0_ref[...].astype(jnp.float32)

    u = u_ref[...]                  # (Hp, 3*Hp), bf16 (or f32) — VMEM resident
    base_t = c * t_chunk
    H = hidden                      # padded hidden (multiple of 128)

    def step(i, h):
        # (bt, 3Hp) hoisted input preactivations for this timestep (f32).
        xg = xg_ref[i].astype(jnp.float32)
        # Single fused recurrent matmul on the MXU, f32 accumulation.
        g = jnp.dot(h.astype(u.dtype), u, preferred_element_type=jnp.float32)
        r = jax.nn.sigmoid(xg[:, 0 * H:1 * H] + g[:, 0 * H:1 * H])
        z = jax.nn.sigmoid(xg[:, 1 * H:2 * H] + g[:, 1 * H:2 * H])
        # Candidate: bias only on the input path (U_h has bias=False in the module).
        n = jnp.tanh(xg[:, 2 * H:3 * H] + r * g[:, 2 * H:3 * H])
        h_new = (1.0 - z) * h + z * n
        # Mask padded tail timesteps so the final hidden matches the true seq_len.
        h_new = jnp.where(base_t + i < seq_len, h_new, h)
        out_ref[i] = h_new.astype(out_ref.dtype)
        return h_new

    h_last = lax.fori_loop(0, t_chunk, step, h_scr[...], unroll=True)
    h_scr[...] = h_last

    @pl.when(c == pl.num_programs(1) - 1)
    def _finalize():
        hfinal_ref[...] = h_last.astype(hfinal_ref.dtype)


def gru_recurrent(xg, h0, u_fused, *, seq_len, t_chunk, batch_tile, out_dtype):
    """Run the serial GRU recurrence over the whole (padded) sequence.

    xg:      (Sp, Bp, 3*Hp) f32   hoisted input preactivations (x@W + b)
    h0:      (Bp, Hp)             initial hidden
    u_fused: (Hp, 3*Hp)           fused recurrent weights (bf16 or f32)
    returns (out (Sp, Bp, Hp), h_final (Bp, Hp))
    """
    Sp, Bp, H3 = xg.shape
    Hp = H3 // 3
    n_chunks = Sp // t_chunk
    n_btiles = Bp // batch_tile

    kernel = functools.partial(
        gru_recurrent_kernel, seq_len=seq_len, t_chunk=t_chunk, hidden=Hp)

    itemsize = jnp.dtype(out_dtype).itemsize
    cost = pl.CostEstimate(
        flops=2 * Sp * Bp * Hp * 3 * Hp + 12 * Sp * Bp * Hp,
        transcendentals=3 * Sp * Bp * Hp,
        bytes_accessed=(xg.size * xg.dtype.itemsize
                        + h0.size * h0.dtype.itemsize
                        + u_fused.size * u_fused.dtype.itemsize
                        + Sp * Bp * Hp * itemsize
                        + Bp * Hp * itemsize),
    )

    return pl.pallas_call(
        kernel,
        out_shape=(jax.ShapeDtypeStruct((Sp, Bp, Hp), out_dtype),
                   jax.ShapeDtypeStruct((Bp, Hp), out_dtype)),
        grid_spec=pltpu.PrefetchScalarGridSpec(
            num_scalar_prefetch=0,
            grid=(n_btiles, n_chunks),
            in_specs=[
                # time-chunked gate preactivations
                pl.BlockSpec((t_chunk, batch_tile, H3), lambda b, c: (c, b, 0)),
                # initial hidden for this batch tile
                pl.BlockSpec((batch_tile, Hp), lambda b, c: (b, 0)),
                # fused recurrent weights, VMEM-resident across the whole grid
                pl.BlockSpec((Hp, H3), lambda b, c: (0, 0)),
            ],
            out_specs=[
                pl.BlockSpec((t_chunk, batch_tile, Hp), lambda b, c: (c, b, 0)),
                pl.BlockSpec((batch_tile, Hp), lambda b, c: (b, 0)),
            ],
            scratch_shapes=[pltpu.VMEM((batch_tile, Hp), jnp.float32)],
        ),
        compiler_params=pltpu.CompilerParams(
            dimension_semantics=("parallel", "arbitrary"),
            vmem_limit_bytes=48 * 1024 * 1024,
        ),
        cost_estimate=cost,
    )(xg, h0, u_fused)


# ---------------------------------------------------------------------------
# Fused / padded parameter packing.
# ---------------------------------------------------------------------------
def _fuse_and_pad(p, in_f, in_fp, H, Hp):
    """Fuse (W_r,W_z,W_h) -> (in_fp, 3Hp), (b_*) -> (1, 3Hp), (U_*) -> (Hp, 3Hp).

    Padded rows/columns are zero, so padded hidden lanes stay exactly zero
    throughout the recurrence and can simply be sliced off at the end.
    """
    dt = jnp.float32
    W = jnp.zeros((in_fp, 3 * Hp), dt)
    b = jnp.zeros((1, 3 * Hp), dt)
    U = jnp.zeros((Hp, 3 * Hp), dt)
    for g, name in enumerate(("r", "z", "h")):
        W = W.at[:in_f, g * Hp:g * Hp + H].set(p[f"W_{name}"].astype(dt))
        b = b.at[:, g * Hp:g * Hp + H].set(p[f"b_{name}"].astype(dt))
        U = U.at[:H, g * Hp:g * Hp + H].set(p[f"U_{name}"].astype(dt))
    return W, b, U


# ---------------------------------------------------------------------------
# Stacked GRU forward (matches the PyTorch module's loop semantics).
# ---------------------------------------------------------------------------
def gru_forward(x, h_0, layer_params, *, compute_dtype=jnp.bfloat16, t_chunk=16):
    """x: (B, S, I), h_0: (L, B, H) -> (outputs (B, S, H), h_t (L, B, H))."""
    B, S, I = x.shape
    L, _, H = h_0.shape
    out_dtype = x.dtype

    Hp = _round_up(H, 128)          # lane-dense hidden (dense vst, full MXU cols)
    Bp = _round_up(B, 8)            # sublane-aligned batch
    bt = min(Bp, 128)               # batch tile; >1 tile => megacore-parallel axis
    Bp = _round_up(Bp, bt)
    tc = min(t_chunk, S)            # timesteps per grid step
    Sp = _round_up(S, tc)

    # Time-major + pad once; stays time-major across layers (no per-layer transposes).
    x_t = jnp.transpose(x, (1, 0, 2)).astype(jnp.float32)          # (S, B, I)
    x_t = jnp.pad(x_t, ((0, Sp - S), (0, Bp - B), (0, 0)))
    h0_p = jnp.pad(h_0.astype(jnp.float32),
                   ((0, 0), (0, Bp - B), (0, Hp - H)))

    finals = []
    for layer, p in enumerate(layer_params):
        in_f = I if layer == 0 else H
        in_fp = I if layer == 0 else Hp
        Wf, bf, Uf = _fuse_and_pad(p, in_f, in_fp, H, Hp)

        # Hoisted input projection: one big parallel (Sp*Bp, in_fp)x(in_fp, 3Hp)
        # bf16 matmul with f32 accumulation, outside the serial time loop.
        xg = jnp.einsum(
            "sbi,ij->sbj",
            x_t.astype(compute_dtype), Wf.astype(compute_dtype),
            preferred_element_type=jnp.float32) + bf

        out_seq, h_fin = gru_recurrent(
            xg, h0_p[layer], Uf.astype(compute_dtype),
            seq_len=S, t_chunk=tc, batch_tile=bt, out_dtype=out_dtype)

        x_t = out_seq.astype(jnp.float32)       # feed next layer (still time-major)
        finals.append(h_fin)

    outputs = jnp.transpose(x_t[:S, :B, :H], (1, 0, 2)).astype(out_dtype)
    h_t = jnp.stack([f[:B, :H] for f in finals], axis=0).astype(out_dtype)
    return outputs, h_t


# ---------------------------------------------------------------------------
# Parameter init + pure-JAX reference (exact PyTorch-module loop order).
# ---------------------------------------------------------------------------
def init_gru_params(key, input_size, hidden_size, num_layers, dtype=jnp.float32):
    """Weights stored pre-transposed: W_* is (in_features, hidden) so x @ W works."""
    params = []
    for layer in range(num_layers):
        in_f = input_size if layer == 0 else hidden_size
        p = {}
        for name, shape, fan_in in [
            ("W_r", (in_f, hidden_size), in_f),
            ("W_z", (in_f, hidden_size), in_f),
            ("W_h", (in_f, hidden_size), in_f),
            ("U_r", (hidden_size, hidden_size), hidden_size),
            ("U_z", (hidden_size, hidden_size), hidden_size),
            ("U_h", (hidden_size, hidden_size), hidden_size),
            ("b_r", (1, hidden_size), in_f),
            ("b_z", (1, hidden_size), in_f),
            ("b_h", (1, hidden_size), in_f),
        ]:
            key, sub = jax.random.split(key)
            bound = 1.0 / (fan_in ** 0.5)
            p[name] = jax.random.uniform(sub, shape, dtype, -bound, bound)
        params.append(p)
    return params


def gru_reference(x, h_0, layer_params):
    """Pure-JAX f32 reference reproducing the PyTorch loop order exactly."""
    B, S, _ = x.shape
    h_t = h_0
    outs = []
    for t in range(S):
        x_t = x[:, t, :]
        h_layer = []
        for layer, p in enumerate(layer_params):
            h_prev = h_t[layer]
            r = jax.nn.sigmoid(x_t @ p["W_r"] + p["b_r"] + h_prev @ p["U_r"])
            z = jax.nn.sigmoid(x_t @ p["W_z"] + p["b_z"] + h_prev @ p["U_z"])
            h_tilde = jnp.tanh(x_t @ p["W_h"] + p["b_h"] + r * (h_prev @ p["U_h"]))
            h_out = (1.0 - z) * h_prev + z * h_tilde
            h_layer.append(h_out)
            x_t = h_out
        h_t = jnp.stack(h_layer)
        outs.append(h_t[-1])
    return jnp.stack(outs, axis=1), h_t


if __name__ == "__main__":
    batch = 2
    seq = 8
    input_size = 16
    hidden_size = 32
    num_layers = 2

    key = jax.random.PRNGKey(0)
    kx, kh, kp = jax.random.split(key, 3)
    x = jax.random.normal(kx, (batch, seq, input_size), jnp.float32)
    h_0 = jax.random.normal(kh, (num_layers, batch, hidden_size), jnp.float32)
    params = init_gru_params(kp, input_size, hidden_size, num_layers)

    ref_out, ref_h = gru_reference(x, h_0, params)

    # Exact-precision path (f32 MXU operands): tight semantic check.
    out_f32, h_f32 = jax.block_until_ready(
        gru_forward(x, h_0, params, compute_dtype=jnp.float32))
    assert out_f32.shape == (batch, seq, hidden_size)
    assert h_f32.shape == (num_layers, batch, hidden_size)
    assert jnp.allclose(out_f32, ref_out, atol=1e-4, rtol=1e-4)
    assert jnp.allclose(h_f32, ref_h, atol=1e-4, rtol=1e-4)

    # Performance path (bf16 MXU operands, f32 hidden-state carry / gates).
    out_bf, h_bf = jax.block_until_ready(
        gru_forward(x, h_0, params, compute_dtype=jnp.bfloat16))
    assert jnp.allclose(out_bf, ref_out, atol=5e-2, rtol=5e-2)
    assert jnp.allclose(h_bf, ref_h, atol=5e-2, rtol=5e-2)

    print("KERNEL_OK")
</pallas_src>

<mosaic_0001>
module attributes {stable_mosaic.version = 11 : i64} {
  func.func @gru_recurrent_kernel(%arg0: i32, %arg1: i32, %arg2: memref<8x8x384xf32, #tpu.memory_space<vmem>>, %arg3: memref<8x128xf32, #tpu.memory_space<vmem>>, %arg4: memref<128x384xf32, #tpu.memory_space<vmem>>, %arg5: memref<8x8x128xf32, #tpu.memory_space<vmem>>, %arg6: memref<8x128xf32, #tpu.memory_space<vmem>>, %arg7: memref<8x128xf32, #tpu.memory_space<vmem>>) attributes {dimension_semantics = [#tpu.dimension_semantics<parallel>, #tpu.dimension_semantics<arbitrary>], iteration_bounds = array<i64: 1, 1>, scalar_prefetch = 0 : i64, scratch_operands = 1 : i64, tpu.core_type = #tpu.core_type<tc>, window_params = [{transform_indices = @transform_0, window_bounds = array<i64: 8, 8, 384>}, {transform_indices = @transform_1, window_bounds = array<i64: 8, 128>}, {pipeline_mode = #tpu.pipeline_mode<synchronous>, transform_indices = @transform_2, window_bounds = array<i64: 128, 384>}, {transform_indices = @transform_3, window_bounds = array<i64: 8, 8, 128>}, {transform_indices = @transform_4, window_bounds = array<i64: 8, 128>}]} {
    %c0_i32 = arith.constant 0 : i32
    %0 = arith.cmpi eq, %arg1, %c0_i32 : i32
    %1 = arith.extui %0 : i1 to i32
    %c0_i32_0 = arith.constant 0 : i32
    %2 = arith.cmpi ne, %1, %c0_i32_0 : i32
    scf.if %2 {
      %c0_81 = arith.constant 0 : index
      %c0_82 = arith.constant 0 : index
      %306 = vector.load %arg3[%c0_81, %c0_82] : memref<8x128xf32, #tpu.memory_space<vmem>>, vector<8x128xf32>
      %c0_83 = arith.constant 0 : index
      %c0_84 = arith.constant 0 : index
      %307 = vector.load %arg7[%c0_83, %c0_84] : memref<8x128xf32, #tpu.memory_space<vmem>>, vector<8x128xf32>
      tpu.vector_store %arg7[%c0_83, %c0_84], %306 {strides = array<i32>} : memref<8x128xf32, #tpu.memory_space<vmem>>, vector<8x128xf32>,
    } else {
    }
    %c0 = arith.constant 0 : index
    %c0_1 = arith.constant 0 : index
    %3 = vector.load %arg4[%c0, %c0_1] : memref<128x384xf32, #tpu.memory_space<vmem>>, vector<128x384xf32>
    %c8_i32 = arith.constant 8 : i32
    %4 = arith.muli %arg1, %c8_i32 : i32
    %c0_2 = arith.constant 0 : index
    %c0_3 = arith.constant 0 : index
    %5 = vector.load %arg7[%c0_2, %c0_3] : memref<8x128xf32, #tpu.memory_space<vmem>>, vector<8x128xf32>
    %c0_i32_4 = arith.constant 0 : i32
    %6 = arith.index_cast %c0_i32_4 : i32 to index
    %c0_5 = arith.constant 0 : index
    %c0_6 = arith.constant 0 : index
    %7 = vector.load %arg2[%6, %c0_5, %c0_6] : memref<8x8x384xf32, #tpu.memory_space<vmem>>, vector<1x8x384xf32>
    %8 = vector.shape_cast %7 : vector<1x8x384xf32> to vector<8x384xf32>
    %cst = arith.constant dense<0.000000e+00> : vector<8x384xf32>
    %9 = tpu.matmul %5, %3, %cst {dimension_numbers = #tpu.dot_dimension_numbers<[1], [0], [0], [1], [0, 0, 1, 1], [], []>} : vector<8x128xf32>, vector<128x384xf32>, vector<8x384xf32> -> vector<8x384xf32>
    %10 = vector.extract_strided_slice %8 {offsets = [0, 0], sizes = [8, 128], strides = [1, 1]} : vector<8x384xf32> to vector<8x128xf32>
    %11 = vector.extract_strided_slice %9 {offsets = [0, 0], sizes = [8, 128], strides = [1, 1]} : vector<8x384xf32> to vector<8x128xf32>
    %12 = arith.addf %10, %11 : vector<8x128xf32>
    %13 = arith.negf %12 : vector<8x128xf32>
    %14 = math.exp %13 : vector<8x128xf32>
    %cst_7 = arith.constant 1.000000e+00 : f32
    %15 = vector.broadcast %cst_7 : f32 to vector<8x128xf32>
    %16 = arith.addf %15, %14 : vector<8x128xf32>
    %17 = arith.divf %15, %16 : vector<8x128xf32>
    %18 = vector.extract_strided_slice %8 {offsets = [0, 128], sizes = [8, 128], strides = [1, 1]} : vector<8x384xf32> to vector<8x128xf32>
    %19 = vector.extract_strided_slice %9 {offsets = [0, 128], sizes = [8, 128], strides = [1, 1]} : vector<8x384xf32> to vector<8x128xf32>
    %20 = arith.addf %18, %19 : vector<8x128xf32>
    %21 = arith.negf %20 : vector<8x128xf32>
    %22 = math.exp %21 : vector<8x128xf32>
    %cst_8 = arith.constant 1.000000e+00 : f32
    %23 = vector.broadcast %cst_8 : f32 to vector<8x128xf32>
    %24 = arith.addf %23, %22 : vector<8x128xf32>
    %25 = arith.divf %23, %24 : vector<8x128xf32>
    %26 = vector.extract_strided_slice %8 {offsets = [0, 256], sizes = [8, 128], strides = [1, 1]} : vector<8x384xf32> to vector<8x128xf32>
    %27 = vector.extract_strided_slice %9 {offsets = [0, 256], sizes = [8, 128], strides = [1, 1]} : vector<8x384xf32> to vector<8x128xf32>
    %28 = arith.mulf %17, %27 : vector<8x128xf32>
    %29 = arith.addf %26, %28 : vector<8x128xf32>
    %30 = math.tanh %29 : vector<8x128xf32>
    %cst_9 = arith.constant 1.000000e+00 : f32
    %31 = vector.broadcast %cst_9 : f32 to vector<8x128xf32>
    %32 = arith.subf %31, %25 : vector<8x128xf32>
    %33 = arith.mulf %32, %5 : vector<8x128xf32>
    %34 = arith.mulf %25, %30 : vector<8x128xf32>
    %35 = arith.addf %33, %34 : vector<8x128xf32>
    %36 = arith.addi %4, %c0_i32_4 : i32
    %c8_i32_10 = arith.constant 8 : i32
    %37 = arith.cmpi slt, %36, %c8_i32_10 : i32
    %38 = arith.select %37, %35, %5 : vector<8x128xf32>
    %39 = arith.index_cast %c0_i32_4 : i32 to index
    %c0_11 = arith.constant 0 : index
    %c0_12 = arith.constant 0 : index
    %40 = vector.load %arg5[%39, %c0_11, %c0_12] : memref<8x8x128xf32, #tpu.memory_space<vmem>>, vector<1x8x128xf32>
    %41 = vector.shape_cast %40 : vector<1x8x128xf32> to vector<8x128xf32>
    %42 = vector.shape_cast %38 : vector<8x128xf32> to vector<1x8x128xf32>
    tpu.vector_store %arg5[%39, %c0_11, %c0_12], %42 {strides = array<i32>} : memref<8x8x128xf32, #tpu.memory_space<vmem>>, vector<1x8x128xf32>,
    %c1_i32 = arith.constant 1 : i32
    %43 = arith.index_cast %c1_i32 : i32 to index
    %c0_13 = arith.constant 0 : index
    %c0_14 = arith.constant 0 : index
    %44 = vector.load %arg2[%43, %c0_13, %c0_14] : memref<8x8x384xf32, #tpu.memory_space<vmem>>, vector<1x8x384xf32>
    %45 = vector.shape_cast %44 : vector<1x8x384xf32> to vector<8x384xf32>
    %cst_15 = arith.constant dense<0.000000e+00> : vector<8x384xf32>
    %46 = tpu.matmul %38, %3, %cst_15 {dimension_numbers = #tpu.dot_dimension_numbers<[1], [0], [0], [1], [0, 0, 1, 1], [], []>} : vector<8x128xf32>, vector<128x384xf32>, vector<8x384xf32> -> vector<8x384xf32>
    %47 = vector.extract_strided_slice %45 {offsets = [0, 0], sizes = [8, 128], strides = [1, 1]} : vector<8x384xf32> to vector<8x128xf32>
    %48 = vector.extract_strided_slice %46 {offsets = [0, 0], sizes = [8, 128], strides = [1, 1]} : vector<8x384xf32> to vector<8x128xf32>
    %49 = arith.addf %47, %48 : vector<8x128xf32>
    %50 = arith.negf %49 : vector<8x128xf32>
    %51 = math.exp %50 : vector<8x128xf32>
    %cst_16 = arith.constant 1.000000e+00 : f32
    %52 = vector.broadcast %cst_16 : f32 to vector<8x128xf32>
    %53 = arith.addf %52, %51 : vector<8x128xf32>
    %54 = arith.divf %52, %53 : vector<8x128xf32>
    %55 = vector.extract_strided_slice %45 {offsets = [0, 128], sizes = [8, 128], strides = [1, 1]} : vector<8x384xf32> to vector<8x128xf32>
    %56 = vector.extract_strided_slice %46 {offsets = [0, 128], sizes = [8, 128], strides = [1, 1]} : vector<8x384xf32> to vector<8x128xf32>
    %57 = arith.addf %55, %56 : vector<8x128xf32>
    %58 = arith.negf %57 : vector<8x128xf32>
    %59 = math.exp %58 : vector<8x128xf32>
    %cst_17 = arith.constant 1.000000e+00 : f32
    %60 = vector.broadcast %cst_17 : f32 to vector<8x128xf32>
    %61 = arith.addf %60, %59 : vector<8x128xf32>
    %62 = arith.divf %60, %61 : vector<8x128xf32>
    %63 = vector.extract_strided_slice %45 {offsets = [0, 256], sizes = [8, 128], strides = [1, 1]} : vector<8x384xf32> to vector<8x128xf32>
    %64 = vector.extract_strided_slice %46 {offsets = [0, 256], sizes = [8, 128], strides = [1, 1]} : vector<8x384xf32> to vector<8x128xf32>
    %65 = arith.mulf %54, %64 : vector<8x128xf32>
    %66 = arith.addf %63, %65 : vector<8x128xf32>
    %67 = math.tanh %66 : vector<8x128xf32>
    %cst_18 = arith.constant 1.000000e+00 : f32
    %68 = vector.broadcast %cst_18 : f32 to vector<8x128xf32>
    %69 = arith.subf %68, %62 : vector<8x128xf32>
    %70 = arith.mulf %69, %38 : vector<8x128xf32>
    %71 = arith.mulf %62, %67 : vector<8x128xf32>
    %72 = arith.addf %70, %71 : vector<8x128xf32>
    %73 = arith.addi %4, %c1_i32 : i32
    %c8_i32_19 = arith.constant 8 : i32
    %74 = arith.cmpi slt, %73, %c8_i32_19 : i32
    %75 = arith.select %74, %72, %38 : vector<8x128xf32>
    %76 = arith.index_cast %c1_i32 : i32 to index
    %c0_20 = arith.constant 0 : index
    %c0_21 = arith.constant 0 : index
    %77 = vector.load %arg5[%76, %c0_20, %c0_21] : memref<8x8x128xf32, #tpu.memory_space<vmem>>, vector<1x8x128xf32>
    %78 = vector.shape_cast %77 : vector<1x8x128xf32> to vector<8x128xf32>
    %79 = vector.shape_cast %75 : vector<8x128xf32> to vector<1x8x128xf32>
    tpu.vector_store %arg5[%76, %c0_20, %c0_21], %79 {strides = array<i32>} : memref<8x8x128xf32, #tpu.memory_space<vmem>>, vector<1x8x128xf32>,
    %c2_i32 = arith.constant 2 : i32
    %80 = arith.index_cast %c2_i32 : i32 to index
    %c0_22 = arith.constant 0 : index
    %c0_23 = arith.constant 0 : index
    %81 = vector.load %arg2[%80, %c0_22, %c0_23] : memref<8x8x384xf32, #tpu.memory_space<vmem>>, vector<1x8x384xf32>
    %82 = vector.shape_cast %81 : vector<1x8x384xf32> to vector<8x384xf32>
    %cst_24 = arith.constant dense<0.000000e+00> : vector<8x384xf32>
    %83 = tpu.matmul %75, %3, %cst_24 {dimension_numbers = #tpu.dot_dimension_numbers<[1], [0], [0], [1], [0, 0, 1, 1], [], []>} : vector<8x128xf32>, vector<128x384xf32>, vector<8x384xf32> -> vector<8x384xf32>
    %84 = vector.extract_strided_slice %82 {offsets = [0, 0], sizes = [8, 128], strides = [1, 1]} : vector<8x384xf32> to vector<8x128xf32>
    %85 = vector.extract_strided_slice %83 {offsets = [0, 0], sizes = [8, 128], strides = [1, 1]} : vector<8x384xf32> to vector<8x128xf32>
    %86 = arith.addf %84, %85 : vector<8x128xf32>
    %87 = arith.negf %86 : vector<8x128xf32>
    %88 = math.exp %87 : vector<8x128xf32>
    %cst_25 = arith.constant 1.000000e+00 : f32
    %89 = vector.broadcast %cst_25 : f32 to vector<8x128xf32>
    %90 = arith.addf %89, %88 : vector<8x128xf32>
    %91 = arith.divf %89, %90 : vector<8x128xf32>
    %92 = vector.extract_strided_slice %82 {offsets = [0, 128], sizes = [8, 128], strides = [1, 1]} : vector<8x384xf32> to vector<8x128xf32>
    %93 = vector.extract_strided_slice %83 {offsets = [0, 128], sizes = [8, 128], strides = [1, 1]} : vector<8x384xf32> to vector<8x128xf32>
    %94 = arith.addf %92, %93 : vector<8x128xf32>
    %95 = arith.negf %94 : vector<8x128xf32>
    %96 = math.exp %95 : vector<8x128xf32>
    %cst_26 = arith.constant 1.000000e+00 : f32
    %97 = vector.broadcast %cst_26 : f32 to vector<8x128xf32>
    %98 = arith.addf %97, %96 : vector<8x128xf32>
    %99 = arith.divf %97, %98 : vector<8x128xf32>
    %100 = vector.extract_strided_slice %82 {offsets = [0, 256], sizes = [8, 128], strides = [1, 1]} : vector<8x384xf32> to vector<8x128xf32>
    %101 = vector.extract_strided_slice %83 {offsets = [0, 256], sizes = [8, 128], strides = [1, 1]} : vector<8x384xf32> to vector<8x128xf32>
    %102 = arith.mulf %91, %101 : vector<8x128xf32>
    %103 = arith.addf %100, %102 : vector<8x128xf32>
    %104 = math.tanh %103 : vector<8x128xf32>
    %cst_27 = arith.constant 1.000000e+00 : f32
    %105 = vector.broadcast %cst_27 : f32 to vector<8x128xf32>
    %106 = arith.subf %105, %99 : vector<8x128xf32>
    %107 = arith.mulf %106, %75 : vector<8x128xf32>
    %108 = arith.mulf %99, %104 : vector<8x128xf32>
    %109 = arith.addf %107, %108 : vector<8x128xf32>
    %110 = arith.addi %4, %c2_i32 : i32
    %c8_i32_28 = arith.constant 8 : i32
    %111 = arith.cmpi slt, %110, %c8_i32_28 : i32
    %112 = arith.select %111, %109, %75 : vector<8x128xf32>
    %113 = arith.index_cast %c2_i32 : i32 to index
    %c0_29 = arith.constant 0 : index
    %c0_30 = arith.constant 0 : index
    %114 = vector.load %arg5[%113, %c0_29, %c0_30] : memref<8x8x128xf32, #tpu.memory_space<vmem>>, vector<1x8x128xf32>
    %115 = vector.shape_cast %114 : vector<1x8x128xf32> to vector<8x128xf32>
    %116 = vector.shape_cast %112 : vector<8x128xf32> to vector<1x8x128xf32>
    tpu.vector_store %arg5[%113, %c0_29, %c0_30], %116 {strides = array<i32>} : memref<8x8x128xf32, #tpu.memory_space<vmem>>, vector<1x8x128xf32>,
    %c3_i32 = arith.constant 3 : i32
    %117 = arith.index_cast %c3_i32 : i32 to index
    %c0_31 = arith.constant 0 : index
    %c0_32 = arith.constant 0 : index
    %118 = vector.load %arg2[%117, %c0_31, %c0_32] : memref<8x8x384xf32, #tpu.memory_space<vmem>>, vector<1x8x384xf32>
    %119 = vector.shape_cast %118 : vector<1x8x384xf32> to vector<8x384xf32>
    %cst_33 = arith.constant dense<0.000000e+00> : vector<8x384xf32>
    %120 = tpu.matmul %112, %3, %cst_33 {dimension_numbers = #tpu.dot_dimension_numbers<[1], [0], [0], [1], [0, 0, 1, 1], [], []>} : vector<8x128xf32>, vector<128x384xf32>, vector<8x384xf32> -> vector<8x384xf32>
    %121 = vector.extract_strided_slice %119 {offsets = [0, 0], sizes = [8, 128], strides = [1, 1]} : vector<8x384xf32> to vector<8x128xf32>
    %122 = vector.extract_strided_slice %120 {offsets = [0, 0], sizes = [8, 128], strides = [1, 1]} : vector<8x384xf32> to vector<8x128xf32>
    %123 = arith.addf %121, %122 : vector<8x128xf32>
    %124 = arith.negf %123 : vector<8x128xf32>
    %125 = math.exp %124 : vector<8x128xf32>
    %cst_34 = arith.constant 1.000000e+00 : f32
    %126 = vector.broadcast %cst_34 : f32 to vector<8x128xf32>
    %127 = arith.addf %126, %125 : vector<8x128xf32>
    %128 = arith.divf %126, %127 : vector<8x128xf32>
    %129 = vector.extract_strided_slice %119 {offsets = [0, 128], sizes = [8, 128], strides = [1, 1]} : vector<8x384xf32> to vector<8x128xf32>
    %130 = vector.extract_strided_slice %120 {offsets = [0, 128], sizes = [8, 128], strides = [1, 1]} : vector<8x384xf32> to vector<8x128xf32>
    %131 = arith.addf %129, %130 : vector<8x128xf32>
    %132 = arith.negf %131 : vector<8x128xf32>
    %133 = math.exp %132 : vector<8x128xf32>
    %cst_35 = arith.constant 1.000000e+00 : f32
    %134 = vector.broadcast %cst_35 : f32 to vector<8x128xf32>
    %135 = arith.addf %134, %133 : vector<8x128xf32>
    %136 = arith.divf %134, %135 : vector<8x128xf32>
    %137 = vector.extract_strided_slice %119 {offsets = [0, 256], sizes = [8, 128], strides = [1, 1]} : vector<8x384xf32> to vector<8x128xf32>
    %138 = vector.extract_strided_slice %120 {offsets = [0, 256], sizes = [8, 128], strides = [1, 1]} : vector<8x384xf32> to vector<8x128xf32>
    %139 = arith.mulf %128, %138 : vector<8x128xf32>
    %140 = arith.addf %137, %139 : vector<8x128xf32>
    %141 = math.tanh %140 : vector<8x128xf32>
    %cst_36 = arith.constant 1.000000e+00 : f32
    %142 = vector.broadcast %cst_36 : f32 to vector<8x128xf32>
    %143 = arith.subf %142, %136 : vector<8x128xf32>
    %144 = arith.mulf %143, %112 : vector<8x128xf32>
    %145 = arith.mulf %136, %141 : vector<8x128xf32>
    %146 = arith.addf %144, %145 : vector<8x128xf32>
    %147 = arith.addi %4, %c3_i32 : i32
    %c8_i32_37 = arith.constant 8 : i32
    %148 = arith.cmpi slt, %147, %c8_i32_37 : i32
    %149 = arith.select %148, %146, %112 : vector<8x128xf32>
    %150 = arith.index_cast %c3_i32 : i32 to index
    %c0_38 = arith.constant 0 : index
    %c0_39 = arith.constant 0 : index
    %151 = vector.load %arg5[%150, %c0_38, %c0_39] : memref<8x8x128xf32, #tpu.memory_space<vmem>>, vector<1x8x128xf32>
    %152 = vector.shape_cast %151 : vector<1x8x128xf32> to vector<8x128xf32>
    %153 = vector.shape_cast %149 : vector<8x128xf32> to vector<1x8x128xf32>
    tpu.vector_store %arg5[%150, %c0_38, %c0_39], %153 {strides = array<i32>} : memref<8x8x128xf32, #tpu.memory_space<vmem>>, vector<1x8x128xf32>,
    %c4_i32 = arith.constant 4 : i32
    %154 = arith.index_cast %c4_i32 : i32 to index
    %c0_40 = arith.constant 0 : index
    %c0_41 = arith.constant 0 : index
    %155 = vector.load %arg2[%154, %c0_40, %c0_41] : memref<8x8x384xf32, #tpu.memory_space<vmem>>, vector<1x8x384xf32>
    %156 = vector.shape_cast %155 : vector<1x8x384xf32> to vector<8x384xf32>
    %cst_42 = arith.constant dense<0.000000e+00> : vector<8x384xf32>
    %157 = tpu.matmul %149, %3, %cst_42 {dimension_numbers = #tpu.dot_dimension_numbers<[1], [0], [0], [1], [0, 0, 1, 1], [], []>} : vector<8x128xf32>, vector<128x384xf32>, vector<8x384xf32> -> vector<8x384xf32>
    %158 = vector.extract_strided_slice %156 {offsets = [0, 0], sizes = [8, 128], strides = [1, 1]} : vector<8x384xf32> to vector<8x128xf32>
    %159 = vector.extract_strided_slice %157 {offsets = [0, 0], sizes = [8, 128], strides = [1, 1]} : vector<8x384xf32> to vector<8x128xf32>
    %160 = arith.addf %158, %159 : vector<8x128xf32>
    %161 = arith.negf %160 : vector<8x128xf32>
    %162 = math.exp %161 : vector<8x128xf32>
    %cst_43 = arith.constant 1.000000e+00 : f32
    %163 = vector.broadcast %cst_43 : f32 to vector<8x128xf32>
    %164 = arith.addf %163, %162 : vector<8x128xf32>
    %165 = arith.divf %163, %164 : vector<8x128xf32>
    %166 = vector.extract_strided_slice %156 {offsets = [0, 128], sizes = [8, 128], strides = [1, 1]} : vector<8x384xf32> to vector<8x128xf32>
    %167 = vector.extract_strided_slice %157 {offsets = [0, 128], sizes = [8, 128], strides = [1, 1]} : vector<8x384xf32> to vector<8x128xf32>
    %168 = arith.addf %166, %167 : vector<8x128xf32>
    %169 = arith.negf %168 : vector<8x128xf32>
    %170 = math.exp %169 : vector<8x128xf32>
    %cst_44 = arith.constant 1.000000e+00 : f32
    %171 = vector.broadcast %cst_44 : f32 to vector<8x128xf32>
    %172 = arith.addf %171, %170 : vector<8x128xf32>
    %173 = arith.divf %171, %172 : vector<8x128xf32>
    %174 = vector.extract_strided_slice %156 {offsets = [0, 256], sizes = [8, 128], strides = [1, 1]} : vector<8x384xf32> to vector<8x128xf32>
    %175 = vector.extract_strided_slice %157 {offsets = [0, 256], sizes = [8, 128], strides = [1, 1]} : vector<8x384xf32> to vector<8x128xf32>
    %176 = arith.mulf %165, %175 : vector<8x128xf32>
    %177 = arith.addf %174, %176 : vector<8x128xf32>
    %178 = math.tanh %177 : vector<8x128xf32>
    %cst_45 = arith.constant 1.000000e+00 : f32
    %179 = vector.broadcast %cst_45 : f32 to vector<8x128xf32>
    %180 = arith.subf %179, %173 : vector<8x128xf32>
    %181 = arith.mulf %180, %149 : vector<8x128xf32>
    %182 = arith.mulf %173, %178 : vector<8x128xf32>
    %183 = arith.addf %181, %182 : vector<8x128xf32>
    %184 = arith.addi %4, %c4_i32 : i32
    %c8_i32_46 = arith.constant 8 : i32
    %185 = arith.cmpi slt, %184, %c8_i32_46 : i32
    %186 = arith.select %185, %183, %149 : vector<8x128xf32>
    %187 = arith.index_cast %c4_i32 : i32 to index
    %c0_47 = arith.constant 0 : index
    %c0_48 = arith.constant 0 : index
    %188 = vector.load %arg5[%187, %c0_47, %c0_48] : memref<8x8x128xf32, #tpu.memory_space<vmem>>, vector<1x8x128xf32>
    %189 = vector.shape_cast %188 : vector<1x8x128xf32> to vector<8x128xf32>
    %190 = vector.shape_cast %186 : vector<8x128xf32> to vector<1x8x128xf32>
    tpu.vector_store %arg5[%187, %c0_47, %c0_48], %190 {strides = array<i32>} : memref<8x8x128xf32, #tpu.memory_space<vmem>>, vector<1x8x128xf32>,
    %c5_i32 = arith.constant 5 : i32
    %191 = arith.index_cast %c5_i32 : i32 to index
    %c0_49 = arith.constant 0 : index
    %c0_50 = arith.constant 0 : index
    %192 = vector.load %arg2[%191, %c0_49, %c0_50] : memref<8x8x384xf32, #tpu.memory_space<vmem>>, vector<1x8x384xf32>
    %193 = vector.shape_cast %192 : vector<1x8x384xf32> to vector<8x384xf32>
    %cst_51 = arith.constant dense<0.000000e+00> : vector<8x384xf32>
    %194 = tpu.matmul %186, %3, %cst_51 {dimension_numbers = #tpu.dot_dimension_numbers<[1], [0], [0], [1], [0, 0, 1, 1], [], []>} : vector<8x128xf32>, vector<128x384xf32>, vector<8x384xf32> -> vector<8x384xf32>
    %195 = vector.extract_strided_slice %193 {offsets = [0, 0], sizes = [8, 128], strides = [1, 1]} : vector<8x384xf32> to vector<8x128xf32>
    %196 = vector.extract_strided_slice %194 {offsets = [0, 0], sizes = [8, 128], strides = [1, 1]} : vector<8x384xf32> to vector<8x128xf32>
    %197 = arith.addf %195, %196 : vector<8x128xf32>
    %198 = arith.negf %197 : vector<8x128xf32>
    %199 = math.exp %198 : vector<8x128xf32>
    %cst_52 = arith.constant 1.000000e+00 : f32
    %200 = vector.broadcast %cst_52 : f32 to vector<8x128xf32>
    %201 = arith.addf %200, %199 : vector<8x128xf32>
    %202 = arith.divf %200, %201 : vector<8x128xf32>
    %203 = vector.extract_strided_slice %193 {offsets = [0, 128], sizes = [8, 128], strides = [1, 1]} : vector<8x384xf32> to vector<8x128xf32>
    %204 = vector.extract_strided_slice %194 {offsets = [0, 128], sizes = [8, 128], strides = [1, 1]} : vector<8x384xf32> to vector<8x128xf32>
    %205 = arith.addf %203, %204 : vector<8x128xf32>
    %206 = arith.negf %205 : vector<8x128xf32>
    %207 = math.exp %206 : vector<8x128xf32>
    %cst_53 = arith.constant 1.000000e+00 : f32
    %208 = vector.broadcast %cst_53 : f32 to vector<8x128xf32>
    %209 = arith.addf %208, %207 : vector<8x128xf32>
    %210 = arith.divf %208, %209 : vector<8x128xf32>
    %211 = vector.extract_strided_slice %193 {offsets = [0, 256], sizes = [8, 128], strides = [1, 1]} : vector<8x384xf32> to vector<8x128xf32>
    %212 = vector.extract_strided_slice %194 {offsets = [0, 256], sizes = [8, 128], strides = [1, 1]} : vector<8x384xf32> to vector<8x128xf32>
    %213 = arith.mulf %202, %212 : vector<8x128xf32>
    %214 = arith.addf %211, %213 : vector<8x128xf32>
    %215 = math.tanh %214 : vector<8x128xf32>
    %cst_54 = arith.constant 1.000000e+00 : f32
    %216 = vector.broadcast %cst_54 : f32 to vector<8x128xf32>
    %217 = arith.subf %216, %210 : vector<8x128xf32>
    %218 = arith.mulf %217, %186 : vector<8x128xf32>
    %219 = arith.mulf %210, %215 : vector<8x128xf32>
    %220 = arith.addf %218, %219 : vector<8x128xf32>
    %221 = arith.addi %4, %c5_i32 : i32
    %c8_i32_55 = arith.constant 8 : i32
    %222 = arith.cmpi slt, %221, %c8_i32_55 : i32
    %223 = arith.select %222, %220, %186 : vector<8x128xf32>
    %224 = arith.index_cast %c5_i32 : i32 to index
    %c0_56 = arith.constant 0 : index
    %c0_57 = arith.constant 0 : index
    %225 = vector.load %arg5[%224, %c0_56, %c0_57] : memref<8x8x128xf32, #tpu.memory_space<vmem>>, vector<1x8x128xf32>
    %226 = vector.shape_cast %225 : vector<1x8x128xf32> to vector<8x128xf32>
    %227 = vector.shape_cast %223 : vector<8x128xf32> to vector<1x8x128xf32>
    tpu.vector_store %arg5[%224, %c0_56, %c0_57], %227 {strides = array<i32>} : memref<8x8x128xf32, #tpu.memory_space<vmem>>, vector<1x8x128xf32>,
    %c6_i32 = arith.constant 6 : i32
    %228 = arith.index_cast %c6_i32 : i32 to index
    %c0_58 = arith.constant 0 : index
    %c0_59 = arith.constant 0 : index
    %229 = vector.load %arg2[%228, %c0_58, %c0_59] : memref<8x8x384xf32, #tpu.memory_space<vmem>>, vector<1x8x384xf32>
    %230 = vector.shape_cast %229 : vector<1x8x384xf32> to vector<8x384xf32>
    %cst_60 = arith.constant dense<0.000000e+00> : vector<8x384xf32>
    %231 = tpu.matmul %223, %3, %cst_60 {dimension_numbers = #tpu.dot_dimension_numbers<[1], [0], [0], [1], [0, 0, 1, 1], [], []>} : vector<8x128xf32>, vector<128x384xf32>, vector<8x384xf32> -> vector<8x384xf32>
    %232 = vector.extract_strided_slice %230 {offsets = [0, 0], sizes = [8, 128], strides = [1, 1]} : vector<8x384xf32> to vector<8x128xf32>
    %233 = vector.extract_strided_slice %231 {offsets = [0, 0], sizes = [8, 128], strides = [1, 1]} : vector<8x384xf32> to vector<8x128xf32>
    %234 = arith.addf %232, %233 : vector<8x128xf32>
    %235 = arith.negf %234 : vector<8x128xf32>
    %236 = math.exp %235 : vector<8x128xf32>
    %cst_61 = arith.constant 1.000000e+00 : f32
    %237 = vector.broadcast %cst_61 : f32 to vector<8x128xf32>
    %238 = arith.addf %237, %236 : vector<8x128xf32>
    %239 = arith.divf %237, %238 : vector<8x128xf32>
    %240 = vector.extract_strided_slice %230 {offsets = [0, 128], sizes = [8, 128], strides = [1, 1]} : vector<8x384xf32> to vector<8x128xf32>
    %241 = vector.extract_strided_slice %231 {offsets = [0, 128], sizes = [8, 128], strides = [1, 1]} : vector<8x384xf32> to vector<8x128xf32>
    %242 = arith.addf %240, %241 : vector<8x128xf32>
    %243 = arith.negf %242 : vector<8x128xf32>
    %244 = math.exp %243 : vector<8x128xf32>
    %cst_62 = arith.constant 1.000000e+00 : f32
    %245 = vector.broadcast %cst_62 : f32 to vector<8x128xf32>
    %246 = arith.addf %245, %244 : vector<8x128xf32>
    %247 = arith.divf %245, %246 : vector<8x128xf32>
    %248 = vector.extract_strided_slice %230 {offsets = [0, 256], sizes = [8, 128], strides = [1, 1]} : vector<8x384xf32> to vector<8x128xf32>
    %249 = vector.extract_strided_slice %231 {offsets = [0, 256], sizes = [8, 128], strides = [1, 1]} : vector<8x384xf32> to vector<8x128xf32>
    %250 = arith.mulf %239, %249 : vector<8x128xf32>
    %251 = arith.addf %248, %250 : vector<8x128xf32>
    %252 = math.tanh %251 : vector<8x128xf32>
    %cst_63 = arith.constant 1.000000e+00 : f32
    %253 = vector.broadcast %cst_63 : f32 to vector<8x128xf32>
    %254 = arith.subf %253, %247 : vector<8x128xf32>
    %255 = arith.mulf %254, %223 : vector<8x128xf32>
    %256 = arith.mulf %247, %252 : vector<8x128xf32>
    %257 = arith.addf %255, %256 : vector<8x128xf32>
    %258 = arith.addi %4, %c6_i32 : i32
    %c8_i32_64 = arith.constant 8 : i32
    %259 = arith.cmpi slt, %258, %c8_i32_64 : i32
    %260 = arith.select %259, %257, %223 : vector<8x128xf32>
    %261 = arith.index_cast %c6_i32 : i32 to index
    %c0_65 = arith.constant 0 : index
    %c0_66 = arith.constant 0 : index
    %262 = vector.load %arg5[%261, %c0_65, %c0_66] : memref<8x8x128xf32, #tpu.memory_space<vmem>>, vector<1x8x128xf32>
    %263 = vector.shape_cast %262 : vector<1x8x128xf32> to vector<8x128xf32>
    %264 = vector.shape_cast %260 : vector<8x128xf32> to vector<1x8x128xf32>
    tpu.vector_store %arg5[%261, %c0_65, %c0_66], %264 {strides = array<i32>} : memref<8x8x128xf32, #tpu.memory_space<vmem>>, vector<1x8x128xf32>,
    %c7_i32 = arith.constant 7 : i32
    %265 = arith.index_cast %c7_i32 : i32 to index
    %c0_67 = arith.constant 0 : index
    %c0_68 = arith.constant 0 : index
    %266 = vector.load %arg2[%265, %c0_67, %c0_68] : memref<8x8x384xf32, #tpu.memory_space<vmem>>, vector<1x8x384xf32>
    %267 = vector.shape_cast %266 : vector<1x8x384xf32> to vector<8x384xf32>
    %cst_69 = arith.constant dense<0.000000e+00> : vector<8x384xf32>
    %268 = tpu.matmul %260, %3, %cst_69 {dimension_numbers = #tpu.dot_dimension_numbers<[1], [0], [0], [1], [0, 0, 1, 1], [], []>} : vector<8x128xf32>, vector<128x384xf32>, vector<8x384xf32> -> vector<8x384xf32>
    %269 = vector.extract_strided_slice %267 {offsets = [0, 0], sizes = [8, 128], strides = [1, 1]} : vector<8x384xf32> to vector<8x128xf32>
    %270 = vector.extract_strided_slice %268 {offsets = [0, 0], sizes = [8, 128], strides = [1, 1]} : vector<8x384xf32> to vector<8x128xf32>
    %271 = arith.addf %269, %270 : vector<8x128xf32>
    %272 = arith.negf %271 : vector<8x128xf32>
    %273 = math.exp %272 : vector<8x128xf32>
    %cst_70 = arith.constant 1.000000e+00 : f32
    %274 = vector.broadcast %cst_70 : f32 to vector<8x128xf32>
    %275 = arith.addf %274, %273 : vector<8x128xf32>
    %276 = arith.divf %274, %275 : vector<8x128xf32>
    %277 = vector.extract_strided_slice %267 {offsets = [0, 128], sizes = [8, 128], strides = [1, 1]} : vector<8x384xf32> to vector<8x128xf32>
    %278 = vector.extract_strided_slice %268 {offsets = [0, 128], sizes = [8, 128], strides = [1, 1]} : vector<8x384xf32> to vector<8x128xf32>
    %279 = arith.addf %277, %278 : vector<8x128xf32>
    %280 = arith.negf %279 : vector<8x128xf32>
    %281 = math.exp %280 : vector<8x128xf32>
    %cst_71 = arith.constant 1.000000e+00 : f32
    %282 = vector.broadcast %cst_71 : f32 to vector<8x128xf32>
    %283 = arith.addf %282, %281 : vector<8x128xf32>
    %284 = arith.divf %282, %283 : vector<8x128xf32>
    %285 = vector.extract_strided_slice %267 {offsets = [0, 256], sizes = [8, 128], strides = [1, 1]} : vector<8x384xf32> to vector<8x128xf32>
    %286 = vector.extract_strided_slice %268 {offsets = [0, 256], sizes = [8, 128], strides = [1, 1]} : vector<8x384xf32> to vector<8x128xf32>
    %287 = arith.mulf %276, %286 : vector<8x128xf32>
    %288 = arith.addf %285, %287 : vector<8x128xf32>
    %289 = math.tanh %288 : vector<8x128xf32>
    %cst_72 = arith.constant 1.000000e+00 : f32
    %290 = vector.broadcast %cst_72 : f32 to vector<8x128xf32>
    %291 = arith.subf %290, %284 : vector<8x128xf32>
    %292 = arith.mulf %291, %260 : vector<8x128xf32>
    %293 = arith.mulf %284, %289 : vector<8x128xf32>
    %294 = arith.addf %292, %293 : vector<8x128xf32>
    %295 = arith.addi %4, %c7_i32 : i32
    %c8_i32_73 = arith.constant 8 : i32
    %296 = arith.cmpi slt, %295, %c8_i32_73 : i32
    %297 = arith.select %296, %294, %260 : vector<8x128xf32>
    %298 = arith.index_cast %c7_i32 : i32 to index
    %c0_74 = arith.constant 0 : index
    %c0_75 = arith.constant 0 : index
    %299 = vector.load %arg5[%298, %c0_74, %c0_75] : memref<8x8x128xf32, #tpu.memory_space<vmem>>, vector<1x8x128xf32>
    %300 = vector.shape_cast %299 : vector<1x8x128xf32> to vector<8x128xf32>
    %301 = vector.shape_cast %297 : vector<8x128xf32> to vector<1x8x128xf32>
    tpu.vector_store %arg5[%298, %c0_74, %c0_75], %301 {strides = array<i32>} : memref<8x8x128xf32, #tpu.memory_space<vmem>>, vector<1x8x128xf32>,
    %c8_i32_76 = arith.constant 8 : i32
    %c0_77 = arith.constant 0 : index
    %c0_78 = arith.constant 0 : index
    %302 = vector.load %arg7[%c0_77, %c0_78] : memref<8x128xf32, #tpu.memory_space<vmem>>, vector<8x128xf32>
    tpu.vector_store %arg7[%c0_77, %c0_78], %297 {strides = array<i32>} : memref<8x128xf32, #tpu.memory_space<vmem>>, vector<8x128xf32>,
    %c0_i32_79 = arith.constant 0 : i32
    %303 = arith.cmpi eq, %arg1, %c0_i32_79 : i32
    %304 = arith.extui %303 : i1 to i32
    %c0_i32_80 = arith.constant 0 : i32
    %305 = arith.cmpi ne, %304, %c0_i32_80 : i32
    scf.if %305 {
      %c0_81 = arith.constant 0 : index
      %c0_82 = arith.constant 0 : index
      %306 = vector.load %arg6[%c0_81, %c0_82] : memref<8x128xf32, #tpu.memory_space<vmem>>, vector<8x128xf32>
      tpu.vector_store %arg6[%c0_81, %c0_82], %297 {strides = array<i32>} : memref<8x128xf32, #tpu.memory_space<vmem>>, vector<8x128xf32>,
    } else {
    }
    return
  }
  func.func @transform_0(%arg0: i32, %arg1: i32) -> (i32, i32, i32) {
    %c0_i32 = arith.constant 0 : i32
    %c0_i32_0 = arith.constant 0 : i32
    return %arg1, %arg0, %c0_i32 : i32, i32, i32
  }
  func.func @transform_1(%arg0: i32, %arg1: i32) -> (i32, i32) {
    %c0_i32 = arith.constant 0 : i32
    %c0_i32_0 = arith.constant 0 : i32
    return %arg0, %c0_i32 : i32, i32
  }
  func.func @transform_2(%arg0: i32, %arg1: i32) -> (i32, i32) {
    %c0_i32 = arith.constant 0 : i32
    %c0_i32_0 = arith.constant 0 : i32
    %c0_i32_1 = arith.constant 0 : i32
    return %c0_i32, %c0_i32_0 : i32, i32
  }
  func.func @transform_3(%arg0: i32, %arg1: i32) -> (i32, i32, i32) {
    %c0_i32 = arith.constant 0 : i32
    %c0_i32_0 = arith.constant 0 : i32
    return %arg1, %arg0, %c0_i32 : i32, i32, i32
  }
  func.func @transform_4(%arg0: i32, %arg1: i32) -> (i32, i32) {
    %c0_i32 = arith.constant 0 : i32
    %c0_i32_0 = arith.constant 0 : i32
    return %arg0, %c0_i32 : i32, i32
  }
}

</mosaic_0001>

<llo_original>
// kernel: tpu_custom_call.1
$region0: #{tpu_custom_call.1}
  #allocation0 [shape = 'u32[]', space=smem, size = 0x4, offset = 0x4, fixed_abs, tag = 'smem constant byte address 0x4 - core index']
  #allocation1 [shape = 'u32[72,128]{1,0:T(1,128)}', space=vmem, size = 0x9000, scoped, tag = 'internal scratch']
  #allocation2 [shape = 'f32[8,128]{1,0:T(8,128)}', space=vmem, size = 0x1000, scoped, tag = 'scratch operand']
  %s0 = inlined_call_operand.hbm [shape: f32[8,8,384], index: 0, kind: input, shape index: {}]
  %s1 = inlined_call_operand.hbm [shape: f32[8,128], index: 1, kind: input, shape index: {}]
  %s2 = inlined_call_operand.hbm [shape: f32[128,384], index: 2, kind: input, shape index: {}]
  %s3 = inlined_call_operand.hbm [shape: f32[8,8,128], index: 3, kind: output, shape index: {0}]
  %s4 = inlined_call_operand.hbm [shape: f32[8,128], index: 4, kind: output, shape index: {1}]
  %5 = xla_tuple %s3, %s4
  %s6 = sld [smem:[#allocation0]]
  $region50: #{tpu_custom_call.1} parent=0
    _
  %s8 = ssub.s32 1, %s6
  %s9 = scalar_select 0, %s8, %s6
  $region1: #{tpu_custom_call.1} parent=0
    #allocation3 [shape = 'u8[98304]{0}', space=vmem, size = 0x18000, scoped, tag = 'input window, operand 0, single buffered']
    #allocation4 [shape = 's32[1]{0}', space=sflag, size = 0x4, scoped, tag = 'scoped memory for tpu_custom_call.1']
    #allocation5 [shape = 's32[1]{0}', space=sflag, size = 0x4, scoped, tag = 'scoped memory for tpu_custom_call.1']
    #allocation6 [shape = 'u8[4096]{0}', space=vmem, size = 0x1000, scoped, tag = 'input window, operand 1, single buffered']
    #allocation7 [shape = 's32[1]{0}', space=sflag, size = 0x4, scoped, tag = 'scoped memory for tpu_custom_call.1']
    #allocation8 [shape = 'u8[196608]{0}', space=vmem, size = 0x30000, scoped, tag = 'input window, operand 2, single buffered']
    #allocation9 [shape = 'u8[32768]{0}', space=vmem, size = 0x8000, scoped, tag = 'output window, operand 0, single buffered']
    #allocation10 [shape = 'u8[4096]{0}', space=vmem, size = 0x1000, scoped, tag = 'output window, operand 1, single buffered']
    #allocation11 [shape = 's32[1]{0}', space=sflag, size = 0x4, scoped, tag = 'scoped memory for tpu_custom_call.1']
    %10 = vsyncpa [#allocation4], 0
    %11 = vsyncpa [#allocation7], 0
    %12 = vsyncpa [#allocation5], 0
    %13 = vsyncpa [#allocation11], 0
    // Predicated region
    $region2: #{tpu_custom_call.1} parent=1 // pred_check
      _
    $region3: #{tpu_custom_call.1} parent=1 // pred_check_branch
      %15 = sbr.rel (0) target = $region5
    $region4: #{tpu_custom_call.1} parent=1 // pred_region
      %17 = vsyncadd [#allocation4], 0
      %s18 = sshll.u32 %s0, 4
      %s19 = int_to_ptr.hbm [resolvable:$true] %s18
      %s20 = sshll.u32 [#allocation3], 4
      %s21 = int_to_ptr.vmem [resolvable:$true] %s20
      %26 = dma.hbm_to_vmem [thread:$0]  %s19, 3072, %s21, [#allocation4], 384, 384, 24
    $region5: #{tpu_custom_call.1} parent=1 // pred_fallthru
      _
    // Predicated region
    $region6: #{tpu_custom_call.1} parent=1 // pred_check
      _
    $region7: #{tpu_custom_call.1} parent=1 // pred_check_branch
      %28 = sbr.rel (0) target = $region9
    $region8: #{tpu_custom_call.1} parent=1 // pred_region
      %30 = vsyncadd [#allocation7], 0
      %s32 = sshll.u32 %s1, 4
      %s33 = int_to_ptr.hbm [resolvable:$true] %s32
      %s34 = sshll.u32 [#allocation6], 4
      %s35 = int_to_ptr.vmem [resolvable:$true] %s34
      %37 = dma.hbm_to_vmem [thread:$0]  %s33, 128, %s35, [#allocation7]
    $region9: #{tpu_custom_call.1} parent=1 // pred_fallthru
      _
    // Predicated region
    $region10: #{tpu_custom_call.1} parent=1 // pred_check
      _
    $region11: #{tpu_custom_call.1} parent=1 // pred_check_branch
      %39 = sbr.rel (0) target = $region13
    $region12: #{tpu_custom_call.1} parent=1 // pred_region
      %41 = vsyncadd [#allocation7], 0
      %s42 = sshll.u32 %s2, 4
      %s43 = int_to_ptr.hbm [resolvable:$true] %s42
      %s44 = sshll.u32 [#allocation8], 4
      %s45 = int_to_ptr.vmem [resolvable:$true] %s44
      %50 = dma.hbm_to_vmem [thread:$0]  %s43, 6144, %s45, [#allocation7], 384, 384, 24
    $region13: #{tpu_custom_call.1} parent=1 // pred_fallthru
      _
    // Predicated region
    $region14: #{tpu_custom_call.1} parent=1 // pred_check
      _
    $region15: #{tpu_custom_call.1} parent=1 // pred_check_branch
      %52 = sbr.rel (0) target = $region17
    $region16: #{tpu_custom_call.1} parent=1 // pred_region
      %54 = dma.done [#allocation4], 3072
    $region17: #{tpu_custom_call.1} parent=1 // pred_fallthru
      _
    // Predicated region
    $region18: #{tpu_custom_call.1} parent=1 // pred_check
      _
    $region19: #{tpu_custom_call.1} parent=1 // pred_check_branch
      %56 = sbr.rel (0) target = $region21
    $region20: #{tpu_custom_call.1} parent=1 // pred_region
      %58 = dma.done [#allocation7], 128
    $region21: #{tpu_custom_call.1} parent=1 // pred_fallthru
      _
    // Predicated region
    $region22: #{tpu_custom_call.1} parent=1 // pred_check
      _
    $region23: #{tpu_custom_call.1} parent=1 // pred_check_branch
      %60 = sbr.rel (0) target = $region25
    $region24: #{tpu_custom_call.1} parent=1 // pred_region
      %62 = dma.done [#allocation7], 6144
    $region25: #{tpu_custom_call.1} parent=1 // pred_fallthru
      _
    %p63 = scmp.eq.s32.totalorder 0, 0
    // Predicated region
    $region26: #{tpu_custom_call.1} parent=1 // pred_check
      %p64 = pneg %p63
    $region27: #{tpu_custom_call.1} parent=1 // pred_check_branch
      %66 = sbr.rel (%p64) target = $region29
    $region28: #{tpu_custom_call.1} parent=1 // pred_region
      %v67 = vld [vmem:[#allocation6] sm:$0xff]
      %68 = vst [vmem:[#allocation2] sm:$0xff] %v67
    $region29: #{tpu_custom_call.1} parent=1 // pred_fallthru
      _
    %v69 = vld [vmem:[#allocation8] sm:$0xff]
    %v70 = vld [vmem:[#allocation8 + $0x8] sm:$0xff]
    %v71 = vld [vmem:[#allocation8 + $0x10] sm:$0xff]
    %v72 = vld [vmem:[#allocation8 + $0x18] sm:$0xff]
    %v73 = vld [vmem:[#allocation8 + $0x20] sm:$0xff]
    %v74 = vld [vmem:[#allocation8 + $0x28] sm:$0xff]
    %v75 = vld [vmem:[#allocation8 + $0x30] sm:$0xff]
    %v76 = vld [vmem:[#allocation8 + $0x38] sm:$0xff]
    %v77 = vld [vmem:[#allocation8 + $0x40] sm:$0xff]
    %v78 = vld [vmem:[#allocation8 + $0x48] sm:$0xff]
    %v79 = vld [vmem:[#allocation8 + $0x50] sm:$0xff]
    %v80 = vld [vmem:[#allocation8 + $0x58] sm:$0xff]
    %v81 = vld [vmem:[#allocation8 + $0x60] sm:$0xff]
    %v82 = vld [vmem:[#allocation8 + $0x68] sm:$0xff]
    %v83 = vld [vmem:[#allocation8 + $0x70] sm:$0xff]
    %v84 = vld [vmem:[#allocation8 + $0x78] sm:$0xff]
    %v85 = vld [vmem:[#allocation8 + $0x80] sm:$0xff]
    %v86 = vld [vmem:[#allocation8 + $0x88] sm:$0xff]
    %v87 = vld [vmem:[#allocation8 + $0x90] sm:$0xff]
    %v88 = vld [vmem:[#allocation8 + $0x98] sm:$0xff]
    %v89 = vld [vmem:[#allocation8 + $0xa0] sm:$0xff]
    %v90 = vld [vmem:[#allocation8 + $0xa8] sm:$0xff]
    %v91 = vld [vmem:[#allocation8 + $0xb0] sm:$0xff]
    %v92 = vld [vmem:[#allocation8 + $0xb8] sm:$0xff]
    %v93 = vld [vmem:[#allocation8 + $0xc0] sm:$0xff]
    %v94 = vld [vmem:[#allocation8 + $0xc8] sm:$0xff]
    %v95 = vld [vmem:[#allocation8 + $0xd0] sm:$0xff]
    %v96 = vld [vmem:[#allocation8 + $0xd8] sm:$0xff]
    %v97 = vld [vmem:[#allocation8 + $0xe0] sm:$0xff]
    %v98 = vld [vmem:[#allocation8 + $0xe8] sm:$0xff]
    %v99 = vld [vmem:[#allocation8 + $0xf0] sm:$0xff]
    %v100 = vld [vmem:[#allocation8 + $0xf8] sm:$0xff]
    %v101 = vld [vmem:[#allocation8 + $0x100] sm:$0xff]
    %v102 = vld [vmem:[#allocation8 + $0x108] sm:$0xff]
    %v103 = vld [vmem:[#allocation8 + $0x110] sm:$0xff]
    %v104 = vld [vmem:[#allocation8 + $0x118] sm:$0xff]
    %v105 = vld [vmem:[#allocation8 + $0x120] sm:$0xff]
    %v106 = vld [vmem:[#allocation8 + $0x128] sm:$0xff]
    %v107 = vld [vmem:[#allocation8 + $0x130] sm:$0xff]
    %v108 = vld [vmem:[#allocation8 + $0x138] sm:$0xff]
    %v109 = vld [vmem:[#allocation8 + $0x140] sm:$0xff]
    %v110 = vld [vmem:[#allocation8 + $0x148] sm:$0xff]
    %v111 = vld [vmem:[#allocation8 + $0x150] sm:$0xff]
    %v112 = vld [vmem:[#allocation8 + $0x158] sm:$0xff]
    %v113 = vld [vmem:[#allocation8 + $0x160] sm:$0xff]
    %v114 = vld [vmem:[#allocation8 + $0x168] sm:$0xff]
    %v115 = vld [vmem:[#allocation8 + $0x170] sm:$0xff]
    %v116 = vld [vmem:[#allocation8 + $0x178] sm:$0xff]
    %s117 = smul.u32 0, 8
    %v118 = vld [vmem:[#allocation2] sm:$0xff]
    %v119 = vld [vmem:[#allocation3] sm:$0xff]
    %v120 = vld [vmem:[#allocation3 + $0x8] sm:$0xff]
    %v121 = vld [vmem:[#allocation3 + $0x10] sm:$0xff]
    %122 = vmatpush.msra.mxu0 %v114
    %123 = vmatpush.msra.mxu0 %v111
    %124 = vmatpush.msra.mxu0 %v108
    %125 = vmatpush.msra.mxu0 %v105
    %126 = vmatpush.msra.mxu0 %v102
    %127 = vmatpush.msra.mxu0 %v99
    %128 = vmatpush.msra.mxu0 %v96
    %129 = vmatpush.msra.mxu0 %v93
    %130 = vmatpush.msra.mxu0 %v90
    %131 = vmatpush.msra.mxu0 %v87
    %132 = vmatpush.msra.mxu0 %v84
    %133 = vmatpush.msra.mxu0 %v81
    %134 = vmatpush.msra.mxu0 %v78
    %135 = vmatpush.msra.mxu0 %v75
    %136 = vmatpush.msra.mxu0 %v72
    %137 = vmatpush.msra.mxu0 %v69
    %138 = vmatmul.f32.gmra.mxu0 %v118
    %v139 = vpop.f32.mrf.mxu0
    %v140 = vadd.f32 0.0, %v139
    %141 = vdwg.mxu0
    %142 = vmatpush.msra.mxu0 %v115
    %143 = vmatpush.msra.mxu0 %v112
    %144 = vmatpush.msra.mxu0 %v109
    %145 = vmatpush.msra.mxu0 %v106
    %146 = vmatpush.msra.mxu0 %v103
    %147 = vmatpush.msra.mxu0 %v100
    %148 = vmatpush.msra.mxu0 %v97
    %149 = vmatpush.msra.mxu0 %v94
    %150 = vmatpush.msra.mxu0 %v91
    %151 = vmatpush.msra.mxu0 %v88
    %152 = vmatpush.msra.mxu0 %v85
    %153 = vmatpush.msra.mxu0 %v82
    %154 = vmatpush.msra.mxu0 %v79
    %155 = vmatpush.msra.mxu0 %v76
    %156 = vmatpush.msra.mxu0 %v73
    %157 = vmatpush.msra.mxu0 %v70
    %158 = vmatmul.f32.gmra.mxu0 %v118
    %v159 = vpop.f32.mrf.mxu0
    %v160 = vadd.f32 0.0, %v159
    %161 = vdwg.mxu0
    %162 = vmatpush.msra.mxu0 %v116
    %163 = vmatpush.msra.mxu0 %v113
    %164 = vmatpush.msra.mxu0 %v110
    %165 = vmatpush.msra.mxu0 %v107
    %166 = vmatpush.msra.mxu0 %v104
    %167 = vmatpush.msra.mxu0 %v101
    %168 = vmatpush.msra.mxu0 %v98
    %169 = vmatpush.msra.mxu0 %v95
    %170 = vmatpush.msra.mxu0 %v92
    %171 = vmatpush.msra.mxu0 %v89
    %172 = vmatpush.msra.mxu0 %v86
    %173 = vmatpush.msra.mxu0 %v83
    %174 = vmatpush.msra.mxu0 %v80
    %175 = vmatpush.msra.mxu0 %v77
    %176 = vmatpush.msra.mxu0 %v74
    %177 = vmatpush.msra.mxu0 %v71
    %178 = vmatmul.f32.gmra.mxu0 %v118
    %v179 = vpop.f32.mrf.mxu0
    %v180 = vadd.f32 0.0, %v179
    %181 = vdwg.mxu0
    %v182 = vadd.f32 %v119, %v140
    %v183 = vxor.u32 %v182, 2147483648
    %v184 = vmul.f32 %v183, 1.442695
    %v185 = vpow.pop %v184
    %v186 = vadd.f32 %v185, 1.0
    %v187 = vrcp.pop %v186
    %v188 = vmul.f32 %v186, %v187
    %v189 = vsub.f32 1.0, %v188
    %v190 = vmul.f32 %v187, %v189
    %v191 = vadd.f32 %v187, %v190
    %vm192 = vweird.f32 %v186
    %vm193 = vweird.f32 %v187
    %vm194 = vmor %vm192, %vm193
    %v195 = vsel %vm194, %v187, %v191
    %v196 = vand.u32 2147483647, %v186
    %vm197 = vcmp.eq.f32.partialorder %v196, 8.507059e+37
    %v198 = vand.u32 %v186, 2147483648
    %v199 = vor.u32 1.1754944e-38, %v198
    %v200 = vsel %vm197, %v199, %v195
    %v201 = vmul.f32 1.0, %v200
    %v202 = vadd.f32 %v120, %v160
    %v203 = vxor.u32 %v202, 2147483648
    %v204 = vmul.f32 %v203, 1.442695
    %v205 = vpow.pop %v204
    %v206 = vadd.f32 %v205, 1.0
    %v207 = vrcp.pop %v206
    %v208 = vmul.f32 %v206, %v207
    %v209 = vsub.f32 1.0, %v208
    %v210 = vmul.f32 %v207, %v209
    %v211 = vadd.f32 %v207, %v210
    %vm212 = vweird.f32 %v206
    %vm213 = vweird.f32 %v207
    %vm214 = vmor %vm212, %vm213
    %v215 = vsel %vm214, %v207, %v211
    %v216 = vand.u32 2147483647, %v206
    %vm217 = vcmp.eq.f32.partialorder %v216, 8.507059e+37
    %v218 = vand.u32 %v206, 2147483648
    %v219 = vor.u32 1.1754944e-38, %v218
    %v220 = vsel %vm217, %v219, %v215
    %v221 = vmul.f32 1.0, %v220
    %v222 = vmul.f32 %v201, %v180
    %v223 = vadd.f32 %v121, %v222
    %v224 = vtanh.pop %v223
    %v225 = vsub.f32 1.0, %v221
    %v226 = vmul.f32 %v225, %v118
    %v227 = vmul.f32 %v221, %v224
    %v228 = vadd.f32 %v226, %v227
    %p229 = scmp.lt.s32.totalorder %s117, 8
    %s230 = scalar_select %p229, 1, 0
    %v231 = vstv %s230
    %vm232 = vcmp.eq.s32.totalorder %v231, 1
    %v233 = vsel %vm232, %v228, %v118
    %234 = vst [vmem:[#allocation9] sm:$0xff] %v233
    %s235 = scalar_lea.vmem [#allocation3], 24
    %v236 = vld [vmem:[%s235] sm:$0xff]
    %v237 = vld [vmem:[%s235 + $0x8] sm:$0xff]
    %v238 = vld [vmem:[%s235 + $0x10] sm:$0xff]
    %239 = vmatpush.msra.mxu0 %v114
    %240 = vmatpush.msra.mxu0 %v111
    %241 = vmatpush.msra.mxu0 %v108
    %242 = vmatpush.msra.mxu0 %v105
    %243 = vmatpush.msra.mxu0 %v102
    %244 = vmatpush.msra.mxu0 %v99
    %245 = vmatpush.msra.mxu0 %v96
    %246 = vmatpush.msra.mxu0 %v93
    %247 = vmatpush.msra.mxu0 %v90
    %248 = vmatpush.msra.mxu0 %v87
    %249 = vmatpush.msra.mxu0 %v84
    %250 = vmatpush.msra.mxu0 %v81
    %251 = vmatpush.msra.mxu0 %v78
    %252 = vmatpush.msra.mxu0 %v75
    %253 = vmatpush.msra.mxu0 %v72
    %254 = vmatpush.msra.mxu0 %v69
    %255 = vmatmul.f32.gmra.mxu0 %v233
    %v256 = vpop.f32.mrf.mxu0
    %v257 = vadd.f32 0.0, %v256
    %258 = vdwg.mxu0
    %259 = vmatpush.msra.mxu0 %v115
    %260 = vmatpush.msra.mxu0 %v112
    %261 = vmatpush.msra.mxu0 %v109
    %262 = vmatpush.msra.mxu0 %v106
    %263 = vmatpush.msra.mxu0 %v103
    %264 = vmatpush.msra.mxu0 %v100
    %265 = vmatpush.msra.mxu0 %v97
    %266 = vmatpush.msra.mxu0 %v94
    %267 = vmatpush.msra.mxu0 %v91
    %268 = vmatpush.msra.mxu0 %v88
    %269 = vmatpush.msra.mxu0 %v85
    %270 = vmatpush.msra.mxu0 %v82
    %271 = vmatpush.msra.mxu0 %v79
    %272 = vmatpush.msra.mxu0 %v76
    %273 = vmatpush.msra.mxu0 %v73
    %274 = vmatpush.msra.mxu0 %v70
    %275 = vmatmul.f32.gmra.mxu0 %v233
    %v276 = vpop.f32.mrf.mxu0
    %v277 = vadd.f32 0.0, %v276
    %278 = vdwg.mxu0
    %279 = vmatpush.msra.mxu0 %v116
    %280 = vmatpush.msra.mxu0 %v113
    %281 = vmatpush.msra.mxu0 %v110
    %282 = vmatpush.msra.mxu0 %v107
    %283 = vmatpush.msra.mxu0 %v104
    %284 = vmatpush.msra.mxu0 %v101
    %285 = vmatpush.msra.mxu0 %v98
    %286 = vmatpush.msra.mxu0 %v95
    %287 = vmatpush.msra.mxu0 %v92
    %288 = vmatpush.msra.mxu0 %v89
    %289 = vmatpush.msra.mxu0 %v86
    %290 = vmatpush.msra.mxu0 %v83
    %291 = vmatpush.msra.mxu0 %v80
    %292 = vmatpush.msra.mxu0 %v77
    %293 = vmatpush.msra.mxu0 %v74
    %294 = vmatpush.msra.mxu0 %v71
    %295 = vmatmul.f32.gmra.mxu0 %v233
    %v296 = vpop.f32.mrf.mxu0
    %v297 = vadd.f32 0.0, %v296
    %298 = vdwg.mxu0
    %v299 = vadd.f32 %v236, %v257
    %v300 = vxor.u32 %v299, 2147483648
    %v301 = vmul.f32 %v300, 1.442695
    %v302 = vpow.pop %v301
    %v303 = vadd.f32 %v302, 1.0
    %v304 = vrcp.pop %v303
    %v305 = vmul.f32 %v303, %v304
    %v306 = vsub.f32 1.0, %v305
    %v307 = vmul.f32 %v304, %v306
    %v308 = vadd.f32 %v304, %v307
    %vm309 = vweird.f32 %v303
    %vm310 = vweird.f32 %v304
    %vm311 = vmor %vm309, %vm310
    %v312 = vsel %vm311, %v304, %v308
    %v313 = vand.u32 2147483647, %v303
    %vm314 = vcmp.eq.f32.partialorder %v313, 8.507059e+37
    %v315 = vand.u32 %v303, 2147483648
    %v316 = vor.u32 1.1754944e-38, %v315
    %v317 = vsel %vm314, %v316, %v312
    %v318 = vmul.f32 1.0, %v317
    %v319 = vadd.f32 %v237, %v277
    %v320 = vxor.u32 %v319, 2147483648
    %v321 = vmul.f32 %v320, 1.442695
    %v322 = vpow.pop %v321
    %v323 = vadd.f32 %v322, 1.0
    %v324 = vrcp.pop %v323
    %v325 = vmul.f32 %v323, %v324
    %v326 = vsub.f32 1.0, %v325
    %v327 = vmul.f32 %v324, %v326
    %v328 = vadd.f32 %v324, %v327
    %vm329 = vweird.f32 %v323
    %vm330 = vweird.f32 %v324
    %vm331 = vmor %vm329, %vm330
    %v332 = vsel %vm331, %v324, %v328
    %v333 = vand.u32 2147483647, %v323
    %vm334 = vcmp.eq.f32.partialorder %v333, 8.507059e+37
    %v335 = vand.u32 %v323, 2147483648
    %v336 = vor.u32 1.1754944e-38, %v335
    %v337 = vsel %vm334, %v336, %v332
    %v338 = vmul.f32 1.0, %v337
    %v339 = vmul.f32 %v318, %v297
    %v340 = vadd.f32 %v238, %v339
    %v341 = vtanh.pop %v340
    %v342 = vsub.f32 1.0, %v338
    %v343 = vmul.f32 %v342, %v233
    %v344 = vmul.f32 %v338, %v341
    %v345 = vadd.f32 %v343, %v344
    %s346 = sadd.s32 %s117, 1
    %p347 = scmp.lt.s32.totalorder %s346, 8
    %s348 = scalar_select %p347, 1, 0
    %v349 = vstv %s348
    %vm350 = vcmp.eq.s32.totalorder %v349, 1
    %v351 = vsel %vm350, %v345, %v233
    %s352 = scalar_lea.vmem [#allocation9], 8
    %353 = vst [vmem:[%s352] sm:$0xff] %v351
    %s354 = scalar_lea.vmem [#allocation3], 48
    %v355 = vld [vmem:[%s354] sm:$0xff]
    %v356 = vld [vmem:[%s354 + $0x8] sm:$0xff]
    %v357 = vld [vmem:[%s354 + $0x10] sm:$0xff]
    %358 = vmatpush.msra.mxu0 %v114
    %359 = vmatpush.msra.mxu0 %v111
    %360 = vmatpush.msra.mxu0 %v108
    %361 = vmatpush.msra.mxu0 %v105
    %362 = vmatpush.msra.mxu0 %v102
    %363 = vmatpush.msra.mxu0 %v99
    %364 = vmatpush.msra.mxu0 %v96
    %365 = vmatpush.msra.mxu0 %v93
    %366 = vmatpush.msra.mxu0 %v90
    %367 = vmatpush.msra.mxu0 %v87
    %368 = vmatpush.msra.mxu0 %v84
    %369 = vmatpush.msra.mxu0 %v81
    %370 = vmatpush.msra.mxu0 %v78
    %371 = vmatpush.msra.mxu0 %v75
    %372 = vmatpush.msra.mxu0 %v72
    %373 = vmatpush.msra.mxu0 %v69
    %374 = vmatmul.f32.gmra.mxu0 %v351
    %v375 = vpop.f32.mrf.mxu0
    %v376 = vadd.f32 0.0, %v375
    %377 = vdwg.mxu0
    %378 = vmatpush.msra.mxu0 %v115
    %379 = vmatpush.msra.mxu0 %v112
    %380 = vmatpush.msra.mxu0 %v109
    %381 = vmatpush.msra.mxu0 %v106
    %382 = vmatpush.msra.mxu0 %v103
    %383 = vmatpush.msra.mxu0 %v100
    %384 = vmatpush.msra.mxu0 %v97
    %385 = vmatpush.msra.mxu0 %v94
    %386 = vmatpush.msra.mxu0 %v91
    %387 = vmatpush.msra.mxu0 %v88
    %388 = vmatpush.msra.mxu0 %v85
    %389 = vmatpush.msra.mxu0 %v82
    %390 = vmatpush.msra.mxu0 %v79
    %391 = vmatpush.msra.mxu0 %v76
    %392 = vmatpush.msra.mxu0 %v73
    %393 = vmatpush.msra.mxu0 %v70
    %394 = vmatmul.f32.gmra.mxu0 %v351
    %v395 = vpop.f32.mrf.mxu0
    %v396 = vadd.f32 0.0, %v395
    %397 = vdwg.mxu0
    %398 = vmatpush.msra.mxu0 %v116
    %399 = vmatpush.msra.mxu0 %v113
    %400 = vmatpush.msra.mxu0 %v110
    %401 = vmatpush.msra.mxu0 %v107
    %402 = vmatpush.msra.mxu0 %v104
    %403 = vmatpush.msra.mxu0 %v101
    %404 = vmatpush.msra.mxu0 %v98
    %405 = vmatpush.msra.mxu0 %v95
    %406 = vmatpush.msra.mxu0 %v92
    %407 = vmatpush.msra.mxu0 %v89
    %408 = vmatpush.msra.mxu0 %v86
    %409 = vmatpush.msra.mxu0 %v83
    %410 = vmatpush.msra.mxu0 %v80
    %411 = vmatpush.msra.mxu0 %v77
    %412 = vmatpush.msra.mxu0 %v74
    %413 = vmatpush.msra.mxu0 %v71
    %414 = vmatmul.f32.gmra.mxu0 %v351
    %v415 = vpop.f32.mrf.mxu0
    %v416 = vadd.f32 0.0, %v415
    %417 = vdwg.mxu0
    %v418 = vadd.f32 %v355, %v376
    %v419 = vxor.u32 %v418, 2147483648
    %v420 = vmul.f32 %v419, 1.442695
    %v421 = vpow.pop %v420
    %v422 = vadd.f32 %v421, 1.0
    %v423 = vrcp.pop %v422
    %v424 = vmul.f32 %v422, %v423
    %v425 = vsub.f32 1.0, %v424
    %v426 = vmul.f32 %v423, %v425
    %v427 = vadd.f32 %v423, %v426
    %vm428 = vweird.f32 %v422
    %vm429 = vweird.f32 %v423
    %vm430 = vmor %vm428, %vm429
    %v431 = vsel %vm430, %v423, %v427
    %v432 = vand.u32 2147483647, %v422
    %vm433 = vcmp.eq.f32.partialorder %v432, 8.507059e+37
    %v434 = vand.u32 %v422, 2147483648
    %v435 = vor.u32 1.1754944e-38, %v434
    %v436 = vsel %vm433, %v435, %v431
    %v437 = vmul.f32 1.0, %v436
    %v438 = vadd.f32 %v356, %v396
    %v439 = vxor.u32 %v438, 2147483648
    %v440 = vmul.f32 %v439, 1.442695
    %v441 = vpow.pop %v440
    %v442 = vadd.f32 %v441, 1.0
    %v443 = vrcp.pop %v442
    %v444 = vmul.f32 %v442, %v443
    %v445 = vsub.f32 1.0, %v444
    %v446 = vmul.f32 %v443, %v445
    %v447 = vadd.f32 %v443, %v446
    %vm448 = vweird.f32 %v442
    %vm449 = vweird.f32 %v443
    %vm450 = vmor %vm448, %vm449
    %v451 = vsel %vm450, %v443, %v447
    %v452 = vand.u32 2147483647, %v442
    %vm453 = vcmp.eq.f32.partialorder %v452, 8.507059e+37
    %v454 = vand.u32 %v442, 2147483648
    %v455 = vor.u32 1.1754944e-38, %v454
    %v456 = vsel %vm453, %v455, %v451
    %v457 = vmul.f32 1.0, %v456
    %v458 = vmul.f32 %v437, %v416
    %v459 = vadd.f32 %v357, %v458
    %v460 = vtanh.pop %v459
    %v461 = vsub.f32 1.0, %v457
    %v462 = vmul.f32 %v461, %v351
    %v463 = vmul.f32 %v457, %v460
    %v464 = vadd.f32 %v462, %v463
    %s465 = sadd.s32 %s117, 2
    %p466 = scmp.lt.s32.totalorder %s465, 8
    %s467 = scalar_select %p466, 1, 0
    %v468 = vstv %s467
    %vm469 = vcmp.eq.s32.totalorder %v468, 1
    %v470 = vsel %vm469, %v464, %v351
    %s471 = scalar_lea.vmem [#allocation9], 16
    %472 = vst [vmem:[%s471] sm:$0xff] %v470
    %s473 = scalar_lea.vmem [#allocation3], 72
    %v474 = vld [vmem:[%s473] sm:$0xff]
    %v475 = vld [vmem:[%s473 + $0x8] sm:$0xff]
    %v476 = vld [vmem:[%s473 + $0x10] sm:$0xff]
    %477 = vmatpush.msra.mxu0 %v114
    %478 = vmatpush.msra.mxu0 %v111
    %479 = vmatpush.msra.mxu0 %v108
    %480 = vmatpush.msra.mxu0 %v105
    %481 = vmatpush.msra.mxu0 %v102
    %482 = vmatpush.msra.mxu0 %v99
    %483 = vmatpush.msra.mxu0 %v96
    %484 = vmatpush.msra.mxu0 %v93
    %485 = vmatpush.msra.mxu0 %v90
    %486 = vmatpush.msra.mxu0 %v87
    %487 = vmatpush.msra.mxu0 %v84
    %488 = vmatpush.msra.mxu0 %v81
    %489 = vmatpush.msra.mxu0 %v78
    %490 = vmatpush.msra.mxu0 %v75
    %491 = vmatpush.msra.mxu0 %v72
    %492 = vmatpush.msra.mxu0 %v69
    %493 = vmatmul.f32.gmra.mxu0 %v470
    %v494 = vpop.f32.mrf.mxu0
    %v495 = vadd.f32 0.0, %v494
    %496 = vdwg.mxu0
    %497 = vmatpush.msra.mxu0 %v115
    %498 = vmatpush.msra.mxu0 %v112
    %499 = vmatpush.msra.mxu0 %v109
    %500 = vmatpush.msra.mxu0 %v106
    %501 = vmatpush.msra.mxu0 %v103
    %502 = vmatpush.msra.mxu0 %v100
    %503 = vmatpush.msra.mxu0 %v97
    %504 = vmatpush.msra.mxu0 %v94
    %505 = vmatpush.msra.mxu0 %v91
    %506 = vmatpush.msra.mxu0 %v88
    %507 = vmatpush.msra.mxu0 %v85
    %508 = vmatpush.msra.mxu0 %v82
    %509 = vmatpush.msra.mxu0 %v79
    %510 = vmatpush.msra.mxu0 %v76
    %511 = vmatpush.msra.mxu0 %v73
    %512 = vmatpush.msra.mxu0 %v70
    %513 = vmatmul.f32.gmra.mxu0 %v470
    %v514 = vpop.f32.mrf.mxu0
    %v515 = vadd.f32 0.0, %v514
    %516 = vdwg.mxu0
    %517 = vmatpush.msra.mxu0 %v116
    %518 = vmatpush.msra.mxu0 %v113
    %519 = vmatpush.msra.mxu0 %v110
    %520 = vmatpush.msra.mxu0 %v107
    %521 = vmatpush.msra.mxu0 %v104
    %522 = vmatpush.msra.mxu0 %v101
    %523 = vmatpush.msra.mxu0 %v98
    %524 = vmatpush.msra.mxu0 %v95
    %525 = vmatpush.msra.mxu0 %v92
    %526 = vmatpush.msra.mxu0 %v89
    %527 = vmatpush.msra.mxu0 %v86
    %528 = vmatpush.msra.mxu0 %v83
    %529 = vmatpush.msra.mxu0 %v80
    %530 = vmatpush.msra.mxu0 %v77
    %531 = vmatpush.msra.mxu0 %v74
    %532 = vmatpush.msra.mxu0 %v71
    %533 = vmatmul.f32.gmra.mxu0 %v470
    %v534 = vpop.f32.mrf.mxu0
    %v535 = vadd.f32 0.0, %v534
    %536 = vdwg.mxu0
    %v537 = vadd.f32 %v474, %v495
    %v538 = vxor.u32 %v537, 2147483648
    %v539 = vmul.f32 %v538, 1.442695
    %v540 = vpow.pop %v539
    %v541 = vadd.f32 %v540, 1.0
    %v542 = vrcp.pop %v541
    %v543 = vmul.f32 %v541, %v542
    %v544 = vsub.f32 1.0, %v543
    %v545 = vmul.f32 %v542, %v544
    %v546 = vadd.f32 %v542, %v545
    %vm547 = vweird.f32 %v541
    %vm548 = vweird.f32 %v542
    %vm549 = vmor %vm547, %vm548
    %v550 = vsel %vm549, %v542, %v546
    %v551 = vand.u32 2147483647, %v541
    %vm552 = vcmp.eq.f32.partialorder %v551, 8.507059e+37
    %v553 = vand.u32 %v541, 2147483648
    %v554 = vor.u32 1.1754944e-38, %v553
    %v555 = vsel %vm552, %v554, %v550
    %v556 = vmul.f32 1.0, %v555
    %v557 = vadd.f32 %v475, %v515
    %v558 = vxor.u32 %v557, 2147483648
    %v559 = vmul.f32 %v558, 1.442695
    %v560 = vpow.pop %v559
    %v561 = vadd.f32 %v560, 1.0
    %v562 = vrcp.pop %v561
    %v563 = vmul.f32 %v561, %v562
    %v564 = vsub.f32 1.0, %v563
    %v565 = vmul.f32 %v562, %v564
    %v566 = vadd.f32 %v562, %v565
    %vm567 = vweird.f32 %v561
    %vm568 = vweird.f32 %v562
    %vm569 = vmor %vm567, %vm568
    %v570 = vsel %vm569, %v562, %v566
    %v571 = vand.u32 2147483647, %v561
    %vm572 = vcmp.eq.f32.partialorder %v571, 8.507059e+37
    %v573 = vand.u32 %v561, 2147483648
    %v574 = vor.u32 1.1754944e-38, %v573
    %v575 = vsel %vm572, %v574, %v570
    %v576 = vmul.f32 1.0, %v575
    %v577 = vmul.f32 %v556, %v535
    %v578 = vadd.f32 %v476, %v577
    %v579 = vtanh.pop %v578
    %v580 = vsub.f32 1.0, %v576
    %v581 = vmul.f32 %v580, %v470
    %v582 = vmul.f32 %v576, %v579
    %v583 = vadd.f32 %v581, %v582
    %s584 = sadd.s32 %s117, 3
    %p585 = scmp.lt.s32.totalorder %s584, 8
    %s586 = scalar_select %p585, 1, 0
    %v587 = vstv %s586
    %vm588 = vcmp.eq.s32.totalorder %v587, 1
    %v589 = vsel %vm588, %v583, %v470
    %s590 = scalar_lea.vmem [#allocation9], 24
    %591 = vst [vmem:[%s590] sm:$0xff] %v589
    %s592 = scalar_lea.vmem [#allocation3], 96
    %v593 = vld [vmem:[%s592] sm:$0xff]
    %v594 = vld [vmem:[%s592 + $0x8] sm:$0xff]
    %v595 = vld [vmem:[%s592 + $0x10] sm:$0xff]
    %596 = vmatpush.msra.mxu0 %v114
    %597 = vmatpush.msra.mxu0 %v111
    %598 = vmatpush.msra.mxu0 %v108
    %599 = vmatpush.msra.mxu0 %v105
    %600 = vmatpush.msra.mxu0 %v102
    %601 = vmatpush.msra.mxu0 %v99
    %602 = vmatpush.msra.mxu0 %v96
    %603 = vmatpush.msra.mxu0 %v93
    %604 = vmatpush.msra.mxu0 %v90
    %605 = vmatpush.msra.mxu0 %v87
    %606 = vmatpush.msra.mxu0 %v84
    %607 = vmatpush.msra.mxu0 %v81
    %608 = vmatpush.msra.mxu0 %v78
    %609 = vmatpush.msra.mxu0 %v75
    %610 = vmatpush.msra.mxu0 %v72
    %611 = vmatpush.msra.mxu0 %v69
    %612 = vmatmul.f32.gmra.mxu0 %v589
    %v613 = vpop.f32.mrf.mxu0
    %v614 = vadd.f32 0.0, %v613
    %615 = vdwg.mxu0
    %616 = vmatpush.msra.mxu0 %v115
    %617 = vmatpush.msra.mxu0 %v112
    %618 = vmatpush.msra.mxu0 %v109
    %619 = vmatpush.msra.mxu0 %v106
    %620 = vmatpush.msra.mxu0 %v103
    %621 = vmatpush.msra.mxu0 %v100
    %622 = vmatpush.msra.mxu0 %v97
    %623 = vmatpush.msra.mxu0 %v94
    %624 = vmatpush.msra.mxu0 %v91
    %625 = vmatpush.msra.mxu0 %v88
    %626 = vmatpush.msra.mxu0 %v85
    %627 = vmatpush.msra.mxu0 %v82
    %628 = vmatpush.msra.mxu0 %v79
    %629 = vmatpush.msra.mxu0 %v76
    %630 = vmatpush.msra.mxu0 %v73
    %631 = vmatpush.msra.mxu0 %v70
    %632 = vmatmul.f32.gmra.mxu0 %v589
    %v633 = vpop.f32.mrf.mxu0
    %v634 = vadd.f32 0.0, %v633
    %635 = vdwg.mxu0
    %636 = vmatpush.msra.mxu0 %v116
    %637 = vmatpush.msra.mxu0 %v113
    %638 = vmatpush.msra.mxu0 %v110
    %639 = vmatpush.msra.mxu0 %v107
    %640 = vmatpush.msra.mxu0 %v104
    %641 = vmatpush.msra.mxu0 %v101
    %642 = vmatpush.msra.mxu0 %v98
    %643 = vmatpush.msra.mxu0 %v95
    %644 = vmatpush.msra.mxu0 %v92
    %645 = vmatpush.msra.mxu0 %v89
    %646 = vmatpush.msra.mxu0 %v86
    %647 = vmatpush.msra.mxu0 %v83
    %648 = vmatpush.msra.mxu0 %v80
    %649 = vmatpush.msra.mxu0 %v77
    %650 = vmatpush.msra.mxu0 %v74
    %651 = vmatpush.msra.mxu0 %v71
    %652 = vmatmul.f32.gmra.mxu0 %v589
    %v653 = vpop.f32.mrf.mxu0
    %v654 = vadd.f32 0.0, %v653
    %655 = vdwg.mxu0
    %v656 = vadd.f32 %v593, %v614
    %v657 = vxor.u32 %v656, 2147483648
    %v658 = vmul.f32 %v657, 1.442695
    %v659 = vpow.pop %v658
    %v660 = vadd.f32 %v659, 1.0
    %v661 = vrcp.pop %v660
    %v662 = vmul.f32 %v660, %v661
    %v663 = vsub.f32 1.0, %v662
    %v664 = vmul.f32 %v661, %v663
    %v665 = vadd.f32 %v661, %v664
    %vm666 = vweird.f32 %v660
    %vm667 = vweird.f32 %v661
    %vm668 = vmor %vm666, %vm667
    %v669 = vsel %vm668, %v661, %v665
    %v670 = vand.u32 2147483647, %v660
    %vm671 = vcmp.eq.f32.partialorder %v670, 8.507059e+37
    %v672 = vand.u32 %v660, 2147483648
    %v673 = vor.u32 1.1754944e-38, %v672
    %v674 = vsel %vm671, %v673, %v669
    %v675 = vmul.f32 1.0, %v674
    %v676 = vadd.f32 %v594, %v634
    %v677 = vxor.u32 %v676, 2147483648
    %v678 = vmul.f32 %v677, 1.442695
    %v679 = vpow.pop %v678
    %v680 = vadd.f32 %v679, 1.0
    %v681 = vrcp.pop %v680
    %v682 = vmul.f32 %v680, %v681
    %v683 = vsub.f32 1.0, %v682
    %v684 = vmul.f32 %v681, %v683
    %v685 = vadd.f32 %v681, %v684
    %vm686 = vweird.f32 %v680
    %vm687 = vweird.f32 %v681
    %vm688 = vmor %vm686, %vm687
    %v689 = vsel %vm688, %v681, %v685
    %v690 = vand.u32 2147483647, %v680
    %vm691 = vcmp.eq.f32.partialorder %v690, 8.507059e+37
    %v692 = vand.u32 %v680, 2147483648
    %v693 = vor.u32 1.1754944e-38, %v692
    %v694 = vsel %vm691, %v693, %v689
    %v695 = vmul.f32 1.0, %v694
    %v696 = vmul.f32 %v675, %v654
    %v697 = vadd.f32 %v595, %v696
    %v698 = vtanh.pop %v697
    %v699 = vsub.f32 1.0, %v695
    %v700 = vmul.f32 %v699, %v589
    %v701 = vmul.f32 %v695, %v698
    %v702 = vadd.f32 %v700, %v701
    %s703 = sadd.s32 %s117, 4
    %p704 = scmp.lt.s32.totalorder %s703, 8
    %s705 = scalar_select %p704, 1, 0
    %v706 = vstv %s705
    %vm707 = vcmp.eq.s32.totalorder %v706, 1
    %v708 = vsel %vm707, %v702, %v589
    %s709 = scalar_lea.vmem [#allocation9], 32
    %710 = vst [vmem:[%s709] sm:$0xff] %v708
    %s711 = scalar_lea.vmem [#allocation3], 120
    %v712 = vld [vmem:[%s711] sm:$0xff]
    %v713 = vld [vmem:[%s711 + $0x8] sm:$0xff]
    %v714 = vld [vmem:[%s711 + $0x10] sm:$0xff]
    %715 = vmatpush.msra.mxu0 %v114
    %716 = vmatpush.msra.mxu0 %v111
    %717 = vmatpush.msra.mxu0 %v108
    %718 = vmatpush.msra.mxu0 %v105
    %719 = vmatpush.msra.mxu0 %v102
    %720 = vmatpush.msra.mxu0 %v99
    %721 = vmatpush.msra.mxu0 %v96
    %722 = vmatpush.msra.mxu0 %v93
    %723 = vmatpush.msra.mxu0 %v90
    %724 = vmatpush.msra.mxu0 %v87
    %725 = vmatpush.msra.mxu0 %v84
    %726 = vmatpush.msra.mxu0 %v81
    %727 = vmatpush.msra.mxu0 %v78
    %728 = vmatpush.msra.mxu0 %v75
    %729 = vmatpush.msra.mxu0 %v72
    %730 = vmatpush.msra.mxu0 %v69
    %731 = vmatmul.f32.gmra.mxu0 %v708
    %v732 = vpop.f32.mrf.mxu0
    %v733 = vadd.f32 0.0, %v732
    %734 = vdwg.mxu0
    %735 = vmatpush.msra.mxu0 %v115
    %736 = vmatpush.msra.mxu0 %v112
    %737 = vmatpush.msra.mxu0 %v109
    %738 = vmatpush.msra.mxu0 %v106
    %739 = vmatpush.msra.mxu0 %v103
    %740 = vmatpush.msra.mxu0 %v100
    %741 = vmatpush.msra.mxu0 %v97
    %742 = vmatpush.msra.mxu0 %v94
    %743 = vmatpush.msra.mxu0 %v91
    %744 = vmatpush.msra.mxu0 %v88
    %745 = vmatpush.msra.mxu0 %v85
    %746 = vmatpush.msra.mxu0 %v82
    %747 = vmatpush.msra.mxu0 %v79
    %748 = vmatpush.msra.mxu0 %v76
    %749 = vmatpush.msra.mxu0 %v73
    %750 = vmatpush.msra.mxu0 %v70
    %751 = vmatmul.f32.gmra.mxu0 %v708
    %v752 = vpop.f32.mrf.mxu0
    %v753 = vadd.f32 0.0, %v752
    %754 = vdwg.mxu0
    %755 = vmatpush.msra.mxu0 %v116
    %756 = vmatpush.msra.mxu0 %v113
    %757 = vmatpush.msra.mxu0 %v110
    %758 = vmatpush.msra.mxu0 %v107
    %759 = vmatpush.msra.mxu0 %v104
    %760 = vmatpush.msra.mxu0 %v101
    %761 = vmatpush.msra.mxu0 %v98
    %762 = vmatpush.msra.mxu0 %v95
    %763 = vmatpush.msra.mxu0 %v92
    %764 = vmatpush.msra.mxu0 %v89
    %765 = vmatpush.msra.mxu0 %v86
    %766 = vmatpush.msra.mxu0 %v83
    %767 = vmatpush.msra.mxu0 %v80
    %768 = vmatpush.msra.mxu0 %v77
    %769 = vmatpush.msra.mxu0 %v74
    %770 = vmatpush.msra.mxu0 %v71
    %771 = vmatmul.f32.gmra.mxu0 %v708
    %v772 = vpop.f32.mrf.mxu0
    %v773 = vadd.f32 0.0, %v772
    %774 = vdwg.mxu0
    %v775 = vadd.f32 %v712, %v733
    %v776 = vxor.u32 %v775, 2147483648
    %v777 = vmul.f32 %v776, 1.442695
    %v778 = vpow.pop %v777
    %v779 = vadd.f32 %v778, 1.0
    %v780 = vrcp.pop %v779
    %v781 = vmul.f32 %v779, %v780
    %v782 = vsub.f32 1.0, %v781
    %v783 = vmul.f32 %v780, %v782
    %v784 = vadd.f32 %v780, %v783
    %vm785 = vweird.f32 %v779
    %vm786 = vweird.f32 %v780
    %vm787 = vmor %vm785, %vm786
    %v788 = vsel %vm787, %v780, %v784
    %v789 = vand.u32 2147483647, %v779
    %vm790 = vcmp.eq.f32.partialorder %v789, 8.507059e+37
    %v791 = vand.u32 %v779, 2147483648
    %v792 = vor.u32 1.1754944e-38, %v791
    %v793 = vsel %vm790, %v792, %v788
    %v794 = vmul.f32 1.0, %v793
    %v795 = vadd.f32 %v713, %v753
    %v796 = vxor.u32 %v795, 2147483648
    %v797 = vmul.f32 %v796, 1.442695
    %v798 = vpow.pop %v797
    %v799 = vadd.f32 %v798, 1.0
    %v800 = vrcp.pop %v799
    %v801 = vmul.f32 %v799, %v800
    %v802 = vsub.f32 1.0, %v801
    %v803 = vmul.f32 %v800, %v802
    %v804 = vadd.f32 %v800, %v803
    %vm805 = vweird.f32 %v799
    %vm806 = vweird.f32 %v800
    %vm807 = vmor %vm805, %vm806
    %v808 = vsel %vm807, %v800, %v804
    %v809 = vand.u32 2147483647, %v799
    %vm810 = vcmp.eq.f32.partialorder %v809, 8.507059e+37
    %v811 = vand.u32 %v799, 2147483648
    %v812 = vor.u32 1.1754944e-38, %v811
    %v813 = vsel %vm810, %v812, %v808
    %v814 = vmul.f32 1.0, %v813
    %v815 = vmul.f32 %v794, %v773
    %v816 = vadd.f32 %v714, %v815
    %v817 = vtanh.pop %v816
    %v818 = vsub.f32 1.0, %v814
    %v819 = vmul.f32 %v818, %v708
    %v820 = vmul.f32 %v814, %v817
    %v821 = vadd.f32 %v819, %v820
    %s822 = sadd.s32 %s117, 5
    %p823 = scmp.lt.s32.totalorder %s822, 8
    %s824 = scalar_select %p823, 1, 0
    %v825 = vstv %s824
    %vm826 = vcmp.eq.s32.totalorder %v825, 1
    %v827 = vsel %vm826, %v821, %v708
    %s828 = scalar_lea.vmem [#allocation9], 40
    %829 = vst [vmem:[%s828] sm:$0xff] %v827
    %s830 = scalar_lea.vmem [#allocation3], 144
    %v831 = vld [vmem:[%s830] sm:$0xff]
    %v832 = vld [vmem:[%s830 + $0x8] sm:$0xff]
    %v833 = vld [vmem:[%s830 + $0x10] sm:$0xff]
    %834 = vmatpush.msra.mxu0 %v114
    %835 = vmatpush.msra.mxu0 %v111
    %836 = vmatpush.msra.mxu0 %v108
    %837 = vmatpush.msra.mxu0 %v105
    %838 = vmatpush.msra.mxu0 %v102
    %839 = vmatpush.msra.mxu0 %v99
    %840 = vmatpush.msra.mxu0 %v96
    %841 = vmatpush.msra.mxu0 %v93
    %842 = vmatpush.msra.mxu0 %v90
    %843 = vmatpush.msra.mxu0 %v87
    %844 = vmatpush.msra.mxu0 %v84
    %845 = vmatpush.msra.mxu0 %v81
    %846 = vmatpush.msra.mxu0 %v78
    %847 = vmatpush.msra.mxu0 %v75
    %848 = vmatpush.msra.mxu0 %v72
    %849 = vmatpush.msra.mxu0 %v69
    %850 = vmatmul.f32.gmra.mxu0 %v827
    %v851 = vpop.f32.mrf.mxu0
    %v852 = vadd.f32 0.0, %v851
    %853 = vdwg.mxu0
    %854 = vmatpush.msra.mxu0 %v115
    %855 = vmatpush.msra.mxu0 %v112
    %856 = vmatpush.msra.mxu0 %v109
    %857 = vmatpush.msra.mxu0 %v106
    %858 = vmatpush.msra.mxu0 %v103
    %859 = vmatpush.msra.mxu0 %v100
    %860 = vmatpush.msra.mxu0 %v97
    %861 = vmatpush.msra.mxu0 %v94
    %862 = vmatpush.msra.mxu0 %v91
    %863 = vmatpush.msra.mxu0 %v88
    %864 = vmatpush.msra.mxu0 %v85
    %865 = vmatpush.msra.mxu0 %v82
    %866 = vmatpush.msra.mxu0 %v79
    %867 = vmatpush.msra.mxu0 %v76
    %868 = vmatpush.msra.mxu0 %v73
    %869 = vmatpush.msra.mxu0 %v70
    %870 = vmatmul.f32.gmra.mxu0 %v827
    %v871 = vpop.f32.mrf.mxu0
    %v872 = vadd.f32 0.0, %v871
    %873 = vdwg.mxu0
    %874 = vmatpush.msra.mxu0 %v116
    %875 = vmatpush.msra.mxu0 %v113
    %876 = vmatpush.msra.mxu0 %v110
    %877 = vmatpush.msra.mxu0 %v107
    %878 = vmatpush.msra.mxu0 %v104
    %879 = vmatpush.msra.mxu0 %v101
    %880 = vmatpush.msra.mxu0 %v98
    %881 = vmatpush.msra.mxu0 %v95
    %882 = vmatpush.msra.mxu0 %v92
    %883 = vmatpush.msra.mxu0 %v89
    %884 = vmatpush.msra.mxu0 %v86
    %885 = vmatpush.msra.mxu0 %v83
    %886 = vmatpush.msra.mxu0 %v80
    %887 = vmatpush.msra.mxu0 %v77
    %888 = vmatpush.msra.mxu0 %v74
    %889 = vmatpush.msra.mxu0 %v71
    %890 = vmatmul.f32.gmra.mxu0 %v827
    %v891 = vpop.f32.mrf.mxu0
    %v892 = vadd.f32 0.0, %v891
    %893 = vdwg.mxu0
    %v894 = vadd.f32 %v831, %v852
    %v895 = vxor.u32 %v894, 2147483648
    %v896 = vmul.f32 %v895, 1.442695
    %v897 = vpow.pop %v896
    %v898 = vadd.f32 %v897, 1.0
    %v899 = vrcp.pop %v898
    %v900 = vmul.f32 %v898, %v899
    %v901 = vsub.f32 1.0, %v900
    %v902 = vmul.f32 %v899, %v901
    %v903 = vadd.f32 %v899, %v902
    %vm904 = vweird.f32 %v898
    %vm905 = vweird.f32 %v899
    %vm906 = vmor %vm904, %vm905
    %v907 = vsel %vm906, %v899, %v903
    %v908 = vand.u32 2147483647, %v898
    %vm909 = vcmp.eq.f32.partialorder %v908, 8.507059e+37
    %v910 = vand.u32 %v898, 2147483648
    %v911 = vor.u32 1.1754944e-38, %v910
    %v912 = vsel %vm909, %v911, %v907
    %v913 = vmul.f32 1.0, %v912
    %v914 = vadd.f32 %v832, %v872
    %v915 = vxor.u32 %v914, 2147483648
    %v916 = vmul.f32 %v915, 1.442695
    %v917 = vpow.pop %v916
    %v918 = vadd.f32 %v917, 1.0
    %v919 = vrcp.pop %v918
    %v920 = vmul.f32 %v918, %v919
    %v921 = vsub.f32 1.0, %v920
    %v922 = vmul.f32 %v919, %v921
    %v923 = vadd.f32 %v919, %v922
    %vm924 = vweird.f32 %v918
    %vm925 = vweird.f32 %v919
    %vm926 = vmor %vm924, %vm925
    %v927 = vsel %vm926, %v919, %v923
    %v928 = vand.u32 2147483647, %v918
    %vm929 = vcmp.eq.f32.partialorder %v928, 8.507059e+37
    %v930 = vand.u32 %v918, 2147483648
    %v931 = vor.u32 1.1754944e-38, %v930
    %v932 = vsel %vm929, %v931, %v927
    %v933 = vmul.f32 1.0, %v932
    %v934 = vmul.f32 %v913, %v892
    %v935 = vadd.f32 %v833, %v934
    %v936 = vtanh.pop %v935
    %v937 = vsub.f32 1.0, %v933
    %v938 = vmul.f32 %v937, %v827
    %v939 = vmul.f32 %v933, %v936
    %v940 = vadd.f32 %v938, %v939
    %s941 = sadd.s32 %s117, 6
    %p942 = scmp.lt.s32.totalorder %s941, 8
    %s943 = scalar_select %p942, 1, 0
    %v944 = vstv %s943
    %vm945 = vcmp.eq.s32.totalorder %v944, 1
    %v946 = vsel %vm945, %v940, %v827
    %s947 = scalar_lea.vmem [#allocation9], 48
    %948 = vst [vmem:[%s947] sm:$0xff] %v946
    %s949 = scalar_lea.vmem [#allocation3], 168
    %v950 = vld [vmem:[%s949] sm:$0xff]
    %v951 = vld [vmem:[%s949 + $0x8] sm:$0xff]
    %v952 = vld [vmem:[%s949 + $0x10] sm:$0xff]
    %953 = vmatpush.msra.mxu0 %v114
    %954 = vmatpush.msra.mxu0 %v111
    %955 = vmatpush.msra.mxu0 %v108
    %956 = vmatpush.msra.mxu0 %v105
    %957 = vmatpush.msra.mxu0 %v102
    %958 = vmatpush.msra.mxu0 %v99
    %959 = vmatpush.msra.mxu0 %v96
    %960 = vmatpush.msra.mxu0 %v93
    %961 = vmatpush.msra.mxu0 %v90
    %962 = vmatpush.msra.mxu0 %v87
    %963 = vmatpush.msra.mxu0 %v84
    %964 = vmatpush.msra.mxu0 %v81
    %965 = vmatpush.msra.mxu0 %v78
    %966 = vmatpush.msra.mxu0 %v75
    %967 = vmatpush.msra.mxu0 %v72
    %968 = vmatpush.msra.mxu0 %v69
    %969 = vmatmul.f32.gmra.mxu0 %v946
    %v970 = vpop.f32.mrf.mxu0
    %v971 = vadd.f32 0.0, %v970
    %972 = vdwg.mxu0
    %973 = vmatpush.msra.mxu0 %v115
    %974 = vmatpush.msra.mxu0 %v112
    %975 = vmatpush.msra.mxu0 %v109
    %976 = vmatpush.msra.mxu0 %v106
    %977 = vmatpush.msra.mxu0 %v103
    %978 = vmatpush.msra.mxu0 %v100
    %979 = vmatpush.msra.mxu0 %v97
    %980 = vmatpush.msra.mxu0 %v94
    %981 = vmatpush.msra.mxu0 %v91
    %982 = vmatpush.msra.mxu0 %v88
    %983 = vmatpush.msra.mxu0 %v85
    %984 = vmatpush.msra.mxu0 %v82
    %985 = vmatpush.msra.mxu0 %v79
    %986 = vmatpush.msra.mxu0 %v76
    %987 = vmatpush.msra.mxu0 %v73
    %988 = vmatpush.msra.mxu0 %v70
    %989 = vmatmul.f32.gmra.mxu0 %v946
    %v990 = vpop.f32.mrf.mxu0
    %v991 = vadd.f32 0.0, %v990
    %992 = vdwg.mxu0
    %993 = vmatpush.msra.mxu0 %v116
    %994 = vmatpush.msra.mxu0 %v113
    %995 = vmatpush.msra.mxu0 %v110
    %996 = vmatpush.msra.mxu0 %v107
    %997 = vmatpush.msra.mxu0 %v104
    %998 = vmatpush.msra.mxu0 %v101
    %999 = vmatpush.msra.mxu0 %v98
    %1000 = vmatpush.msra.mxu0 %v95
    %1001 = vmatpush.msra.mxu0 %v92
    %1002 = vmatpush.msra.mxu0 %v89
    %1003 = vmatpush.msra.mxu0 %v86
    %1004 = vmatpush.msra.mxu0 %v83
    %1005 = vmatpush.msra.mxu0 %v80
    %1006 = vmatpush.msra.mxu0 %v77
    %1007 = vmatpush.msra.mxu0 %v74
    %1008 = vmatpush.msra.mxu0 %v71
    %1009 = vmatmul.f32.gmra.mxu0 %v946
    %v1010 = vpop.f32.mrf.mxu0
    %v1011 = vadd.f32 0.0, %v1010
    %1012 = vdwg.mxu0
    %v1013 = vadd.f32 %v950, %v971
    %v1014 = vxor.u32 %v1013, 2147483648
    %v1015 = vmul.f32 %v1014, 1.442695
    %v1016 = vpow.pop %v1015
    %v1017 = vadd.f32 %v1016, 1.0
    %v1018 = vrcp.pop %v1017
    %v1019 = vmul.f32 %v1017, %v1018
    %v1020 = vsub.f32 1.0, %v1019
    %v1021 = vmul.f32 %v1018, %v1020
    %v1022 = vadd.f32 %v1018, %v1021
    %vm1023 = vweird.f32 %v1017
    %vm1024 = vweird.f32 %v1018
    %vm1025 = vmor %vm1023, %vm1024
    %v1026 = vsel %vm1025, %v1018, %v1022
    %v1027 = vand.u32 2147483647, %v1017
    %vm1028 = vcmp.eq.f32.partialorder %v1027, 8.507059e+37
    %v1029 = vand.u32 %v1017, 2147483648
    %v1030 = vor.u32 1.1754944e-38, %v1029
    %v1031 = vsel %vm1028, %v1030, %v1026
    %v1032 = vmul.f32 1.0, %v1031
    %v1033 = vadd.f32 %v951, %v991
    %v1034 = vxor.u32 %v1033, 2147483648
    %v1035 = vmul.f32 %v1034, 1.442695
    %v1036 = vpow.pop %v1035
    %v1037 = vadd.f32 %v1036, 1.0
    %v1038 = vrcp.pop %v1037
    %v1039 = vmul.f32 %v1037, %v1038
    %v1040 = vsub.f32 1.0, %v1039
    %v1041 = vmul.f32 %v1038, %v1040
    %v1042 = vadd.f32 %v1038, %v1041
    %vm1043 = vweird.f32 %v1037
    %vm1044 = vweird.f32 %v1038
    %vm1045 = vmor %vm1043, %vm1044
    %v1046 = vsel %vm1045, %v1038, %v1042
    %v1047 = vand.u32 2147483647, %v1037
    %vm1048 = vcmp.eq.f32.partialorder %v1047, 8.507059e+37
    %v1049 = vand.u32 %v1037, 2147483648
    %v1050 = vor.u32 1.1754944e-38, %v1049
    %v1051 = vsel %vm1048, %v1050, %v1046
    %v1052 = vmul.f32 1.0, %v1051
    %v1053 = vmul.f32 %v1032, %v1011
    %v1054 = vadd.f32 %v952, %v1053
    %v1055 = vtanh.pop %v1054
    %v1056 = vsub.f32 1.0, %v1052
    %v1057 = vmul.f32 %v1056, %v946
    %v1058 = vmul.f32 %v1052, %v1055
    %v1059 = vadd.f32 %v1057, %v1058
    %s1060 = sadd.s32 %s117, 7
    %p1061 = scmp.lt.s32.totalorder %s1060, 8
    %s1062 = scalar_select %p1061, 1, 0
    %v1063 = vstv %s1062
    %vm1064 = vcmp.eq.s32.totalorder %v1063, 1
    %v1065 = vsel %vm1064, %v1059, %v946
    %s1066 = scalar_lea.vmem [#allocation9], 56
    %1067 = vst [vmem:[%s1066] sm:$0xff] %v1065
    %1068 = vst [vmem:[#allocation2] sm:$0xff] %v1065
    // Predicated region
    $region30: #{tpu_custom_call.1} parent=1 // pred_check
      %p1069 = pneg %p63
    $region31: #{tpu_custom_call.1} parent=1 // pred_check_branch
      %1071 = sbr.rel (%p1069) target = $region33
    $region32: #{tpu_custom_call.1} parent=1 // pred_region
      %1072 = vst [vmem:[#allocation10] sm:$0xff] %v1065
    $region33: #{tpu_custom_call.1} parent=1 // pred_fallthru
      _
    // Predicated region
    $region34: #{tpu_custom_call.1} parent=1 // pred_check
      _
    $region35: #{tpu_custom_call.1} parent=1 // pred_check_branch
      %1074 = sbr.rel (0) target = $region37
    $region36: #{tpu_custom_call.1} parent=1 // pred_region
      %1076 = vsyncadd [#allocation5], 0
      %s1077 = sshll.u32 [#allocation9], 4
      %s1078 = int_to_ptr.vmem [resolvable:$true] %s1077
      %s1079 = sshll.u32 %s3, 4
      %s1080 = int_to_ptr.hbm [resolvable:$true] %s1079
      %1085 = dma.vmem_to_hbm [thread:$0]  %s1078, 1024, %s1080, [#allocation5], 128, 128, 8
    $region37: #{tpu_custom_call.1} parent=1 // pred_fallthru
      _
    // Predicated region
    $region38: #{tpu_custom_call.1} parent=1 // pred_check
      _
    $region39: #{tpu_custom_call.1} parent=1 // pred_check_branch
      %1087 = sbr.rel (0) target = $region41
    $region40: #{tpu_custom_call.1} parent=1 // pred_region
      %1089 = vsyncadd [#allocation11], 0
      %s1091 = sshll.u32 [#allocation10], 4
      %s1092 = int_to_ptr.vmem [resolvable:$true] %s1091
      %s1093 = sshll.u32 %s4, 4
      %s1094 = int_to_ptr.hbm [resolvable:$true] %s1093
      %1096 = dma.vmem_to_hbm [thread:$0]  %s1092, 128, %s1094, [#allocation11]
    $region41: #{tpu_custom_call.1} parent=1 // pred_fallthru
      _
    // Predicated region
    $region42: #{tpu_custom_call.1} parent=1 // pred_check
      _
    $region43: #{tpu_custom_call.1} parent=1 // pred_check_branch
      %1098 = sbr.rel (0) target = $region45
    $region44: #{tpu_custom_call.1} parent=1 // pred_region
      %1100 = dma.done [#allocation5], 1024
    $region45: #{tpu_custom_call.1} parent=1 // pred_fallthru
      _
    // Predicated region
    $region46: #{tpu_custom_call.1} parent=1 // pred_check
      _
    $region47: #{tpu_custom_call.1} parent=1 // pred_check_branch
      %1102 = sbr.rel (0) target = $region49
    $region48: #{tpu_custom_call.1} parent=1 // pred_region
      %1104 = dma.done [#allocation11], 128
    $region49: #{tpu_custom_call.1} parent=1 // pred_fallthru
      _
    %1105 = vsyncpa [#allocation4], 1
    %1106 = vsyncpa [#allocation7], 1
    %1107 = vsyncpa [#allocation5], 1
    %1108 = vsyncpa [#allocation11], 1

</llo_original>
